<compile_context>
chip_gen: v6e
topology: v6e:2x2x1
jax: 0.10.0
libtpu: 0.0.40
codegen_flags: <defaults>
</compile_context>

<pallas_src>
import functools

import jax
import jax.numpy as jnp
from jax.experimental import pallas as pl
from jax.experimental.pallas import tpu as pltpu

H1, H2 = 400, 300          # logical hidden widths (PyTorch module)
H1P, H2P = 512, 384        # lane-padded (multiple-of-128) hidden widths


def _round_up(x, m):
    return (x + m - 1) // m * m


def actor_kernel(state_ref, action_ref,
                 w1s_ref, w1a_ref, b1_ref, w2_ref, b2_ref, w3_ref, b3_ref,
                 out_ref, *, scale, max_action):
    # scale = phi * max_action, max_action: Python floats baked at trace time.
    action_f32 = action_ref[...]                                   # (TB, A) f32

    # l1: concat-free -> state @ W1_s + action @ W1_a  (bf16 in, f32 accum)
    h1 = jnp.dot(state_ref[...].astype(jnp.bfloat16), w1s_ref[...],
                 preferred_element_type=jnp.float32)
    h1 = h1 + jnp.dot(action_f32.astype(jnp.bfloat16), w1a_ref[...],
                      preferred_element_type=jnp.float32)
    h1 = jnp.maximum(h1 + b1_ref[...], 0.0)                        # relu

    # l2 + relu
    h2 = jnp.dot(h1.astype(jnp.bfloat16), w2_ref[...],
                 preferred_element_type=jnp.float32)
    h2 = jnp.maximum(h2 + b2_ref[...], 0.0)

    # l3 + tanh, scale, residual add, clamp
    a3 = jnp.dot(h2.astype(jnp.bfloat16), w3_ref[...],
                 preferred_element_type=jnp.float32)
    a3 = scale * jnp.tanh(a3 + b3_ref[...])
    out_ref[...] = jnp.clip(a3 + action_f32, -max_action, max_action)


def prepare_actor_params(params, state_dim):
    """One-time prep: split l1, zero-pad hidden dims to lane multiples, bf16 weights."""
    w1, b1, w2, b2, w3, b3 = params                     # weights stored (in, out)
    action_dim = w3.shape[1]

    w1_s = jnp.pad(w1[:state_dim], ((0, 0), (0, H1P - H1))).astype(jnp.bfloat16)
    w1_a = jnp.pad(w1[state_dim:], ((0, 0), (0, H1P - H1))).astype(jnp.bfloat16)
    b1p = jnp.pad(b1, (0, H1P - H1)).reshape(1, H1P).astype(jnp.float32)

    w2p = jnp.pad(w2, ((0, H1P - H1), (0, H2P - H2))).astype(jnp.bfloat16)
    b2p = jnp.pad(b2, (0, H2P - H2)).reshape(1, H2P).astype(jnp.float32)

    w3p = jnp.pad(w3, ((0, H2P - H2), (0, 0))).astype(jnp.bfloat16)
    b3p = b3.reshape(1, action_dim).astype(jnp.float32)

    return (w1_s, w1_a, b1p, w2p, b2p, w3p, b3p)


def actor_forward(state, action, prepped, max_action, phi=0.05, block_b=512):
    """Pallas implementation of Actor.forward(state, action)."""
    B, state_dim = state.shape
    action_dim = action.shape[1]
    w1_s, w1_a, b1, w2, b2, w3, b3 = prepped

    # Batch tiling: TB rows per grid step (multiple of 8), pad B up if needed.
    TB = min(block_b, _round_up(B, 8))
    Bp = _round_up(B, TB)
    if Bp != B:
        state = jnp.pad(state, ((0, Bp - B), (0, 0)))
        action = jnp.pad(action, ((0, Bp - B), (0, 0)))
    grid = (Bp // TB,)

    def batch_spec(d):
        return pl.BlockSpec((TB, d), lambda i: (i, 0))

    def resident_spec(shape):
        # constant index_map -> DMA'd once, stays VMEM-resident across steps
        return pl.BlockSpec(shape, lambda i: (0, 0))

    in_dim = state_dim + action_dim
    cost = pl.CostEstimate(
        flops=2 * Bp * (in_dim * H1P + H1P * H2P + H2P * action_dim),
        transcendentals=Bp * action_dim,
        bytes_accessed=(Bp * (state_dim + 2 * action_dim) * 4
                        + (w1_s.size + w1_a.size + w2.size + w3.size) * 2
                        + (b1.size + b2.size + b3.size) * 4),
    )

    kernel = functools.partial(actor_kernel,
                               scale=float(phi) * float(max_action),
                               max_action=float(max_action))

    out = pl.pallas_call(
        kernel,
        out_shape=jax.ShapeDtypeStruct((Bp, action_dim), jnp.float32),
        grid=grid,
        in_specs=[batch_spec(state_dim), batch_spec(action_dim),
                  resident_spec(w1_s.shape), resident_spec(w1_a.shape),
                  resident_spec(b1.shape),
                  resident_spec(w2.shape), resident_spec(b2.shape),
                  resident_spec(w3.shape), resident_spec(b3.shape)],
        out_specs=batch_spec(action_dim),
        compiler_params=pltpu.CompilerParams(
            dimension_semantics=("parallel",)),
        cost_estimate=cost,
    )(state, action, w1_s, w1_a, b1, w2, b2, w3, b3)

    return out[:B]


def init_actor_params(key, state_dim, action_dim):
    """Deterministic parameter init. Weights stored as (in_dim, out_dim)."""
    ks = jax.random.split(key, 6)

    def lin(kw, kb, fan_in, fan_out):
        bound = 1.0 / jnp.sqrt(fan_in)
        w = jax.random.uniform(kw, (fan_in, fan_out), jnp.float32, -bound, bound)
        b = jax.random.uniform(kb, (fan_out,), jnp.float32, -bound, bound)
        return w, b

    w1, b1 = lin(ks[0], ks[1], state_dim + action_dim, H1)
    w2, b2 = lin(ks[2], ks[3], H1, H2)
    w3, b3 = lin(ks[4], ks[5], H2, action_dim)
    return (w1, b1, w2, b2, w3, b3)


def actor_forward_ref(state, action, params, max_action, phi=0.05):
    """Pure-JAX f32 reference (matches the PyTorch module)."""
    w1, b1, w2, b2, w3, b3 = params
    sa = jnp.concatenate([state, action], axis=1)
    a = jax.nn.relu(sa @ w1 + b1)
    a = jax.nn.relu(a @ w2 + b2)
    a = phi * max_action * jnp.tanh(a @ w3 + b3)
    return jnp.clip(a + action, -max_action, max_action)


if __name__ == "__main__":
    key = jax.random.PRNGKey(0)
    k_p, k_s, k_a = jax.random.split(key, 3)

    B, state_dim, action_dim = 64, 17, 6
    max_action = 1.0
    phi = 0.05

    params = init_actor_params(k_p, state_dim, action_dim)
    state = jax.random.normal(k_s, (B, state_dim), jnp.float32)
    action = jnp.clip(jax.random.normal(k_a, (B, action_dim), jnp.float32),
                      -max_action, max_action)

    prepped = prepare_actor_params(params, state_dim)
    # block_b=32 -> grid=(2,) even at this small demo batch, exercising tiling.
    out = actor_forward(state, action, prepped, max_action, phi, block_b=32)
    out = jax.block_until_ready(out)

    ref = actor_forward_ref(state, action, params, max_action, phi)
    assert out.shape == (B, action_dim)
    max_err = float(jnp.max(jnp.abs(out - ref)))
    # bf16 weights / f32 accumulation: relax tolerance vs pure-f32 reference.
    assert jnp.allclose(out, ref, atol=1e-2, rtol=1e-2), \
        f"mismatch vs reference (max abs err {max_err})"

    print("KERNEL_OK")
</pallas_src>

<mosaic_0001>
module attributes {stable_mosaic.version = 11 : i64} {
  func.func @actor_kernel(%arg0: i32, %arg1: memref<32x17xf32, #tpu.memory_space<vmem>>, %arg2: memref<32x6xf32, #tpu.memory_space<vmem>>, %arg3: memref<17x512xbf16, #tpu.memory_space<vmem>>, %arg4: memref<6x512xbf16, #tpu.memory_space<vmem>>, %arg5: memref<1x512xf32, #tpu.memory_space<vmem>>, %arg6: memref<512x384xbf16, #tpu.memory_space<vmem>>, %arg7: memref<1x384xf32, #tpu.memory_space<vmem>>, %arg8: memref<384x6xbf16, #tpu.memory_space<vmem>>, %arg9: memref<1x6xf32, #tpu.memory_space<vmem>>, %arg10: memref<32x6xf32, #tpu.memory_space<vmem>>) attributes {dimension_semantics = [#tpu.dimension_semantics<parallel>], iteration_bounds = array<i64: 2>, scalar_prefetch = 0 : i64, scratch_operands = 0 : i64, tpu.core_type = #tpu.core_type<tc>, window_params = [{transform_indices = @transform_0, window_bounds = array<i64: 32, 17>}, {transform_indices = @transform_1, window_bounds = array<i64: 32, 6>}, {pipeline_mode = #tpu.pipeline_mode<synchronous>, transform_indices = @transform_2, window_bounds = array<i64: 17, 512>}, {pipeline_mode = #tpu.pipeline_mode<synchronous>, transform_indices = @transform_3, window_bounds = array<i64: 6, 512>}, {pipeline_mode = #tpu.pipeline_mode<synchronous>, transform_indices = @transform_4, window_bounds = array<i64: 1, 512>}, {pipeline_mode = #tpu.pipeline_mode<synchronous>, transform_indices = @transform_5, window_bounds = array<i64: 512, 384>}, {pipeline_mode = #tpu.pipeline_mode<synchronous>, transform_indices = @transform_6, window_bounds = array<i64: 1, 384>}, {pipeline_mode = #tpu.pipeline_mode<synchronous>, transform_indices = @transform_7, window_bounds = array<i64: 384, 6>}, {pipeline_mode = #tpu.pipeline_mode<synchronous>, transform_indices = @transform_8, window_bounds = array<i64: 1, 6>}, {transform_indices = @transform_9, window_bounds = array<i64: 32, 6>}]} {
    %c0 = arith.constant 0 : index
    %c0_0 = arith.constant 0 : index
    %0 = vector.load %arg2[%c0, %c0_0] : memref<32x6xf32, #tpu.memory_space<vmem>>, vector<32x6xf32>
    %c0_1 = arith.constant 0 : index
    %c0_2 = arith.constant 0 : index
    %1 = vector.load %arg1[%c0_1, %c0_2] : memref<32x17xf32, #tpu.memory_space<vmem>>, vector<32x17xf32>
    %2 = arith.truncf %1 : vector<32x17xf32> to vector<32x17xbf16>
    %c0_3 = arith.constant 0 : index
    %c0_4 = arith.constant 0 : index
    %3 = vector.load %arg3[%c0_3, %c0_4] : memref<17x512xbf16, #tpu.memory_space<vmem>>, vector<17x512xbf16>
    %cst = arith.constant dense<0.000000e+00> : vector<32x512xf32>
    %4 = tpu.matmul %2, %3, %cst {dimension_numbers = #tpu.dot_dimension_numbers<[1], [0], [0], [1], [0, 0, 1, 1], [], []>} : vector<32x17xbf16>, vector<17x512xbf16>, vector<32x512xf32> -> vector<32x512xf32>
    %5 = arith.truncf %0 : vector<32x6xf32> to vector<32x6xbf16>
    %c0_5 = arith.constant 0 : index
    %c0_6 = arith.constant 0 : index
    %6 = vector.load %arg4[%c0_5, %c0_6] : memref<6x512xbf16, #tpu.memory_space<vmem>>, vector<6x512xbf16>
    %cst_7 = arith.constant dense<0.000000e+00> : vector<32x512xf32>
    %7 = tpu.matmul %5, %6, %cst_7 {dimension_numbers = #tpu.dot_dimension_numbers<[1], [0], [0], [1], [0, 0, 1, 1], [], []>} : vector<32x6xbf16>, vector<6x512xbf16>, vector<32x512xf32> -> vector<32x512xf32>
    %8 = arith.addf %4, %7 : vector<32x512xf32>
    %c0_8 = arith.constant 0 : index
    %c0_9 = arith.constant 0 : index
    %9 = vector.load %arg5[%c0_8, %c0_9] : memref<1x512xf32, #tpu.memory_space<vmem>>, vector<1x512xf32>
    %10 = vector.broadcast %9 : vector<1x512xf32> to vector<32x512xf32>
    %11 = arith.addf %8, %10 : vector<32x512xf32>
    %cst_10 = arith.constant 0.000000e+00 : f32
    %12 = vector.broadcast %cst_10 : f32 to vector<32x512xf32>
    %13 = arith.maximumf %11, %12 : vector<32x512xf32>
    %14 = arith.truncf %13 : vector<32x512xf32> to vector<32x512xbf16>
    %c0_11 = arith.constant 0 : index
    %c0_12 = arith.constant 0 : index
    %15 = vector.load %arg6[%c0_11, %c0_12] : memref<512x384xbf16, #tpu.memory_space<vmem>>, vector<512x384xbf16>
    %cst_13 = arith.constant dense<0.000000e+00> : vector<32x384xf32>
    %16 = tpu.matmul %14, %15, %cst_13 {dimension_numbers = #tpu.dot_dimension_numbers<[1], [0], [0], [1], [0, 0, 1, 1], [], []>} : vector<32x512xbf16>, vector<512x384xbf16>, vector<32x384xf32> -> vector<32x384xf32>
    %c0_14 = arith.constant 0 : index
    %c0_15 = arith.constant 0 : index
    %17 = vector.load %arg7[%c0_14, %c0_15] : memref<1x384xf32, #tpu.memory_space<vmem>>, vector<1x384xf32>
    %18 = vector.broadcast %17 : vector<1x384xf32> to vector<32x384xf32>
    %19 = arith.addf %16, %18 : vector<32x384xf32>
    %cst_16 = arith.constant 0.000000e+00 : f32
    %20 = vector.broadcast %cst_16 : f32 to vector<32x384xf32>
    %21 = arith.maximumf %19, %20 : vector<32x384xf32>
    %22 = arith.truncf %21 : vector<32x384xf32> to vector<32x384xbf16>
    %c0_17 = arith.constant 0 : index
    %c0_18 = arith.constant 0 : index
    %23 = vector.load %arg8[%c0_17, %c0_18] : memref<384x6xbf16, #tpu.memory_space<vmem>>, vector<384x6xbf16>
    %cst_19 = arith.constant dense<0.000000e+00> : vector<32x6xf32>
    %24 = tpu.matmul %22, %23, %cst_19 {dimension_numbers = #tpu.dot_dimension_numbers<[1], [0], [0], [1], [0, 0, 1, 1], [], []>} : vector<32x384xbf16>, vector<384x6xbf16>, vector<32x6xf32> -> vector<32x6xf32>
    %c0_20 = arith.constant 0 : index
    %c0_21 = arith.constant 0 : index
    %25 = vector.load %arg9[%c0_20, %c0_21] : memref<1x6xf32, #tpu.memory_space<vmem>>, vector<1x6xf32>
    %26 = vector.broadcast %25 : vector<1x6xf32> to vector<32x6xf32>
    %27 = arith.addf %24, %26 : vector<32x6xf32>
    %28 = math.tanh %27 : vector<32x6xf32>
    %cst_22 = arith.constant 5.000000e-02 : f32
    %29 = vector.broadcast %cst_22 : f32 to vector<32x6xf32>
    %30 = arith.mulf %29, %28 : vector<32x6xf32>
    %31 = arith.addf %30, %0 : vector<32x6xf32>
    %cst_23 = arith.constant -1.000000e+00 : f32
    %cst_24 = arith.constant 1.000000e+00 : f32
    %32 = vector.broadcast %cst_23 : f32 to vector<32x6xf32>
    %33 = arith.maximumf %32, %31 : vector<32x6xf32>
    %34 = vector.broadcast %cst_24 : f32 to vector<32x6xf32>
    %35 = arith.minimumf %34, %33 : vector<32x6xf32>
    %c0_25 = arith.constant 0 : index
    %c0_26 = arith.constant 0 : index
    %36 = vector.load %arg10[%c0_25, %c0_26] : memref<32x6xf32, #tpu.memory_space<vmem>>, vector<32x6xf32>
    tpu.vector_store %arg10[%c0_25, %c0_26], %35 {strides = array<i32>} : memref<32x6xf32, #tpu.memory_space<vmem>>, vector<32x6xf32>,
    return
  }
  func.func @transform_0(%arg0: i32) -> (i32, i32) {
    %c0_i32 = arith.constant 0 : i32
    %c0_i32_0 = arith.constant 0 : i32
    return %arg0, %c0_i32 : i32, i32
  }
  func.func @transform_1(%arg0: i32) -> (i32, i32) {
    %c0_i32 = arith.constant 0 : i32
    %c0_i32_0 = arith.constant 0 : i32
    return %arg0, %c0_i32 : i32, i32
  }
  func.func @transform_2(%arg0: i32) -> (i32, i32) {
    %c0_i32 = arith.constant 0 : i32
    %c0_i32_0 = arith.constant 0 : i32
    %c0_i32_1 = arith.constant 0 : i32
    return %c0_i32, %c0_i32_0 : i32, i32
  }
  func.func @transform_3(%arg0: i32) -> (i32, i32) {
    %c0_i32 = arith.constant 0 : i32
    %c0_i32_0 = arith.constant 0 : i32
    %c0_i32_1 = arith.constant 0 : i32
    return %c0_i32, %c0_i32_0 : i32, i32
  }
  func.func @transform_4(%arg0: i32) -> (i32, i32) {
    %c0_i32 = arith.constant 0 : i32
    %c0_i32_0 = arith.constant 0 : i32
    %c0_i32_1 = arith.constant 0 : i32
    return %c0_i32, %c0_i32_0 : i32, i32
  }
  func.func @transform_5(%arg0: i32) -> (i32, i32) {
    %c0_i32 = arith.constant 0 : i32
    %c0_i32_0 = arith.constant 0 : i32
    %c0_i32_1 = arith.constant 0 : i32
    return %c0_i32, %c0_i32_0 : i32, i32
  }
  func.func @transform_6(%arg0: i32) -> (i32, i32) {
    %c0_i32 = arith.constant 0 : i32
    %c0_i32_0 = arith.constant 0 : i32
    %c0_i32_1 = arith.constant 0 : i32
    return %c0_i32, %c0_i32_0 : i32, i32
  }
  func.func @transform_7(%arg0: i32) -> (i32, i32) {
    %c0_i32 = arith.constant 0 : i32
    %c0_i32_0 = arith.constant 0 : i32
    %c0_i32_1 = arith.constant 0 : i32
    return %c0_i32, %c0_i32_0 : i32, i32
  }
  func.func @transform_8(%arg0: i32) -> (i32, i32) {
    %c0_i32 = arith.constant 0 : i32
    %c0_i32_0 = arith.constant 0 : i32
    %c0_i32_1 = arith.constant 0 : i32
    return %c0_i32, %c0_i32_0 : i32, i32
  }
  func.func @transform_9(%arg0: i32) -> (i32, i32) {
    %c0_i32 = arith.constant 0 : i32
    %c0_i32_0 = arith.constant 0 : i32
    return %arg0, %c0_i32 : i32, i32
  }
}

</mosaic_0001>

<llo_original>
// kernel: tpu_custom_call.1
$region0: #{tpu_custom_call.1}
  #allocation0 [shape = 'u32[]', space=smem, size = 0x4, offset = 0x4, fixed_abs, tag = 'smem constant byte address 0x4 - core index']
  #allocation1 [shape = 'u32[144,128]{1,0:T(1,128)}', space=vmem, size = 0x12000, scoped, tag = 'internal scratch']
  %s0 = inlined_call_operand.vmem [shape: f32[64,17], index: 0, kind: input, shape index: {}]
  %s1 = inlined_call_operand.vmem [shape: f32[64,6], index: 1, kind: input, shape index: {}]
  %s2 = inlined_call_operand.vmem [shape: bf16[17,512], index: 2, kind: input, shape index: {}]
  %s3 = inlined_call_operand.vmem [shape: bf16[6,512], index: 3, kind: input, shape index: {}]
  %s4 = inlined_call_operand.vmem [shape: f32[1,512], index: 4, kind: input, shape index: {}]
  %s5 = inlined_call_operand.hbm [shape: bf16[512,384], index: 5, kind: input, shape index: {}]
  %s6 = inlined_call_operand.vmem [shape: f32[1,384], index: 6, kind: input, shape index: {}]
  %s7 = inlined_call_operand.vmem [shape: bf16[384,6], index: 7, kind: input, shape index: {}]
  %s8 = inlined_call_operand.vmem [shape: f32[1,6], index: 8, kind: input, shape index: {}]
  %s9 = inlined_call_operand.vmem [shape: f32[64,6], index: 9, kind: output, shape index: {}]
  %s10 = sld [smem:[#allocation0]]
  $region73: #{tpu_custom_call.1} parent=0
    _
  %s12 = ssub.s32 1, %s10
  %s13 = scalar_select 0, %s12, %s10
  $region1: #{tpu_custom_call.1} parent=0
    #allocation2 [shape = 'u8[393216]{0}', space=vmem, size = 0x60000, scoped, tag = 'input window, operand 5, single buffered']
    #allocation3 [shape = 's32[2]{0}', space=sflag, size = 0x8, scoped, tag = 'scoped memory for tpu_custom_call.1']
    %14 = vsyncpa [#allocation3], 0
    loop: start=0, step=1, limit=4
    $region2: #{tpu_custom_call.1} parent=1 // loop_pre_header
      _
    $region3: #{tpu_custom_call.1} parent=1 // loop_header
      %s16 = sphi 0, %s20
      %p17 = scmp.ge.s32.totalorder %s16, 4
      %s26 = sphi 0, %s28
      %s29 = sphi 0, %s26
      %s30 = sphi 0, %s29
      %s46 = sphi 0, %s30
      %s52 = sphi 0, %s54
      %s55 = sphi 0, %s52
      %s56 = sphi 0, %s55
      %s72 = sphi 0, %s56
      %s76 = sphi 0, %s76
      %s78 = sphi 0, %s76
      %s79 = sphi 0, %s78
      %s93 = sphi 0, %s79
      %s97 = sphi 0, %s97
      %s99 = sphi 0, %s97
      %s100 = sphi 0, %s99
      %s114 = sphi 0, %s100
      %s118 = sphi 0, %s118
      %s120 = sphi 0, %s118
      %s121 = sphi 0, %s120
      %s135 = sphi 0, %s121
      %s139 = sphi 0, %s139
      %s141 = sphi 0, %s139
      %s142 = sphi 0, %s141
      %s156 = sphi 0, %s142
      %s160 = sphi 0, %s160
      %s162 = sphi 0, %s160
      %s163 = sphi 0, %s162
      %s177 = sphi 0, %s163
      %s181 = sphi 0, %s181
      %s183 = sphi 0, %s181
      %s184 = sphi 0, %s183
      %s198 = sphi 0, %s184
      %s202 = sphi 0, %s202
      %s204 = sphi 0, %s202
      %s205 = sphi 0, %s204
      %s219 = sphi 0, %s205
      %s225 = sphi 0, %s227
      %s228 = sphi 0, %s225
      %s229 = sphi 0, %s228
      %s245 = sphi 0, %s229
    $region4: #{tpu_custom_call.1} parent=1 // loop_header_branch
      %19 = sbr.rel (%p17) target = $region8
    $region5: #{tpu_custom_call.1} parent=1 // loop_body
      %s21 = ssub.s32 %s16, 1
      %s22 = ssub.s32 %s16, 2
      %s23 = sadd.s32 %s16, 1
      %s24 = ssub.s32 %s16, %s23
      %p25 = scmp.eq.s32.totalorder %s24, 0
      %s27 = sadd.s32 %s26, 1
      %s28 = scalar_select %p25, %s26, %s27
      %p31 = pneg %p25
      %p32 = scmp.eq.s32.totalorder %s16, 1
      %p33 = por %p31, %p32
      %p34 = scmp.ne.s32.totalorder %s26, %s29
      %p35 = scmp.eq.s32.totalorder %s16, 0
      %p36 = por %p34, %p35
      %p37 = scmp.ne.s32.totalorder %s26, %s29
      %p38 = scmp.eq.s32.totalorder %s21, 1
      %p39 = por %p37, %p38
      %p40 = scmp.ne.s32.totalorder %s29, %s30
      %p41 = scmp.eq.s32.totalorder %s21, 0
      %p42 = por %p40, %p41
      %p43 = scmp.ne.s32.totalorder %s29, %s30
      %p44 = scmp.eq.s32.totalorder %s22, 1
      %p45 = por %p43, %p44
      %p47 = scmp.ne.s32.totalorder %s30, %s46
      %p48 = scmp.eq.s32.totalorder %s22, 0
      %p49 = por %p47, %p48
      %s50 = ssub.s32 %s16, %s23
      %p51 = scmp.eq.s32.totalorder %s50, 0
      %s53 = sadd.s32 %s52, 1
      %s54 = scalar_select %p51, %s52, %s53
      %p57 = pneg %p51
      %p58 = scmp.eq.s32.totalorder %s16, 1
      %p59 = por %p57, %p58
      %p60 = scmp.ne.s32.totalorder %s52, %s55
      %p61 = scmp.eq.s32.totalorder %s16, 0
      %p62 = por %p60, %p61
      %p63 = scmp.ne.s32.totalorder %s52, %s55
      %p64 = scmp.eq.s32.totalorder %s21, 1
      %p65 = por %p63, %p64
      %p66 = scmp.ne.s32.totalorder %s55, %s56
      %p67 = scmp.eq.s32.totalorder %s21, 0
      %p68 = por %p66, %p67
      %p69 = scmp.ne.s32.totalorder %s55, %s56
      %p70 = scmp.eq.s32.totalorder %s22, 1
      %p71 = por %p69, %p70
      %p73 = scmp.ne.s32.totalorder %s56, %s72
      %p74 = scmp.eq.s32.totalorder %s22, 0
      %p75 = por %p73, %p74
      %s77 = sadd.s32 %s76, 1
      %p80 = scmp.eq.s32.totalorder %s16, 1
      %p81 = scmp.ne.s32.totalorder %s76, %s78
      %p82 = scmp.eq.s32.totalorder %s16, 0
      %p83 = por %p81, %p82
      %p84 = scmp.ne.s32.totalorder %s76, %s78
      %p85 = scmp.eq.s32.totalorder %s21, 1
      %p86 = por %p84, %p85
      %p87 = scmp.ne.s32.totalorder %s78, %s79
      %p88 = scmp.eq.s32.totalorder %s21, 0
      %p89 = por %p87, %p88
      %p90 = scmp.ne.s32.totalorder %s78, %s79
      %p91 = scmp.eq.s32.totalorder %s22, 1
      %p92 = por %p90, %p91
      %p94 = scmp.ne.s32.totalorder %s79, %s93
      %p95 = scmp.eq.s32.totalorder %s22, 0
      %p96 = por %p94, %p95
      %s98 = sadd.s32 %s97, 1
      %p101 = scmp.eq.s32.totalorder %s16, 1
      %p102 = scmp.ne.s32.totalorder %s97, %s99
      %p103 = scmp.eq.s32.totalorder %s16, 0
      %p104 = por %p102, %p103
      %p105 = scmp.ne.s32.totalorder %s97, %s99
      %p106 = scmp.eq.s32.totalorder %s21, 1
      %p107 = por %p105, %p106
      %p108 = scmp.ne.s32.totalorder %s99, %s100
      %p109 = scmp.eq.s32.totalorder %s21, 0
      %p110 = por %p108, %p109
      %p111 = scmp.ne.s32.totalorder %s99, %s100
      %p112 = scmp.eq.s32.totalorder %s22, 1
      %p113 = por %p111, %p112
      %p115 = scmp.ne.s32.totalorder %s100, %s114
      %p116 = scmp.eq.s32.totalorder %s22, 0
      %p117 = por %p115, %p116
      %s119 = sadd.s32 %s118, 1
      %p122 = scmp.eq.s32.totalorder %s16, 1
      %p123 = scmp.ne.s32.totalorder %s118, %s120
      %p124 = scmp.eq.s32.totalorder %s16, 0
      %p125 = por %p123, %p124
      %p126 = scmp.ne.s32.totalorder %s118, %s120
      %p127 = scmp.eq.s32.totalorder %s21, 1
      %p128 = por %p126, %p127
      %p129 = scmp.ne.s32.totalorder %s120, %s121
      %p130 = scmp.eq.s32.totalorder %s21, 0
      %p131 = por %p129, %p130
      %p132 = scmp.ne.s32.totalorder %s120, %s121
      %p133 = scmp.eq.s32.totalorder %s22, 1
      %p134 = por %p132, %p133
      %p136 = scmp.ne.s32.totalorder %s121, %s135
      %p137 = scmp.eq.s32.totalorder %s22, 0
      %p138 = por %p136, %p137
      %s140 = sadd.s32 %s139, 1
      %p143 = scmp.eq.s32.totalorder %s16, 1
      %p144 = scmp.ne.s32.totalorder %s139, %s141
      %p145 = scmp.eq.s32.totalorder %s16, 0
      %p146 = por %p144, %p145
      %p147 = scmp.ne.s32.totalorder %s139, %s141
      %p148 = scmp.eq.s32.totalorder %s21, 1
      %p149 = por %p147, %p148
      %p150 = scmp.ne.s32.totalorder %s141, %s142
      %p151 = scmp.eq.s32.totalorder %s21, 0
      %p152 = por %p150, %p151
      %p153 = scmp.ne.s32.totalorder %s141, %s142
      %p154 = scmp.eq.s32.totalorder %s22, 1
      %p155 = por %p153, %p154
      %p157 = scmp.ne.s32.totalorder %s142, %s156
      %p158 = scmp.eq.s32.totalorder %s22, 0
      %p159 = por %p157, %p158
      %s161 = sadd.s32 %s160, 1
      %p164 = scmp.eq.s32.totalorder %s16, 1
      %p165 = scmp.ne.s32.totalorder %s160, %s162
      %p166 = scmp.eq.s32.totalorder %s16, 0
      %p167 = por %p165, %p166
      %p168 = scmp.ne.s32.totalorder %s160, %s162
      %p169 = scmp.eq.s32.totalorder %s21, 1
      %p170 = por %p168, %p169
      %p171 = scmp.ne.s32.totalorder %s162, %s163
      %p172 = scmp.eq.s32.totalorder %s21, 0
      %p173 = por %p171, %p172
      %p174 = scmp.ne.s32.totalorder %s162, %s163
      %p175 = scmp.eq.s32.totalorder %s22, 1
      %p176 = por %p174, %p175
      %p178 = scmp.ne.s32.totalorder %s163, %s177
      %p179 = scmp.eq.s32.totalorder %s22, 0
      %p180 = por %p178, %p179
      %s182 = sadd.s32 %s181, 1
      %p185 = scmp.eq.s32.totalorder %s16, 1
      %p186 = scmp.ne.s32.totalorder %s181, %s183
      %p187 = scmp.eq.s32.totalorder %s16, 0
      %p188 = por %p186, %p187
      %p189 = scmp.ne.s32.totalorder %s181, %s183
      %p190 = scmp.eq.s32.totalorder %s21, 1
      %p191 = por %p189, %p190
      %p192 = scmp.ne.s32.totalorder %s183, %s184
      %p193 = scmp.eq.s32.totalorder %s21, 0
      %p194 = por %p192, %p193
      %p195 = scmp.ne.s32.totalorder %s183, %s184
      %p196 = scmp.eq.s32.totalorder %s22, 1
      %p197 = por %p195, %p196
      %p199 = scmp.ne.s32.totalorder %s184, %s198
      %p200 = scmp.eq.s32.totalorder %s22, 0
      %p201 = por %p199, %p200
      %s203 = sadd.s32 %s202, 1
      %p206 = scmp.eq.s32.totalorder %s16, 1
      %p207 = scmp.ne.s32.totalorder %s202, %s204
      %p208 = scmp.eq.s32.totalorder %s16, 0
      %p209 = por %p207, %p208
      %p210 = scmp.ne.s32.totalorder %s202, %s204
      %p211 = scmp.eq.s32.totalorder %s21, 1
      %p212 = por %p210, %p211
      %p213 = scmp.ne.s32.totalorder %s204, %s205
      %p214 = scmp.eq.s32.totalorder %s21, 0
      %p215 = por %p213, %p214
      %p216 = scmp.ne.s32.totalorder %s204, %s205
      %p217 = scmp.eq.s32.totalorder %s22, 1
      %p218 = por %p216, %p217
      %p220 = scmp.ne.s32.totalorder %s205, %s219
      %p221 = scmp.eq.s32.totalorder %s22, 0
      %p222 = por %p220, %p221
      %s223 = ssub.s32 %s16, %s23
      %p224 = scmp.eq.s32.totalorder %s223, 0
      %s226 = sadd.s32 %s225, 1
      %s227 = scalar_select %p224, %s225, %s226
      %p230 = pneg %p224
      %p231 = scmp.eq.s32.totalorder %s16, 1
      %p232 = por %p230, %p231
      %p233 = scmp.ne.s32.totalorder %s225, %s228
      %p234 = scmp.eq.s32.totalorder %s16, 0
      %p235 = por %p233, %p234
      %p236 = scmp.ne.s32.totalorder %s225, %s228
      %p237 = scmp.eq.s32.totalorder %s21, 1
      %p238 = por %p236, %p237
      %p239 = scmp.ne.s32.totalorder %s228, %s229
      %p240 = scmp.eq.s32.totalorder %s21, 0
      %p241 = por %p239, %p240
      %p242 = scmp.ne.s32.totalorder %s228, %s229
      %p243 = scmp.eq.s32.totalorder %s22, 1
      %p244 = por %p242, %p243
      %p246 = scmp.ne.s32.totalorder %s229, %s245
      %p247 = scmp.eq.s32.totalorder %s22, 0
      %p248 = por %p246, %p247
      %p249 = scmp.le.s32.totalorder 1, %s16
      %p250 = scmp.lt.s32.totalorder %s16, 3
      %p251 = pnand %p249, %p250
      %p252 = pneg %p251
      // Predicated region
      $region9: #{tpu_custom_call.1} parent=5 // pred_check
        _
      $region10: #{tpu_custom_call.1} parent=5 // pred_check_branch
        %254 = sbr.rel (%p251) target = $region12
      $region11: #{tpu_custom_call.1} parent=5 // pred_region
        %s255 = ssub.s32 %s16, 1
        // Predicated region
        $region13: #{tpu_custom_call.1} parent=11 // pred_check
          %p256 = pneg %p89
        $region14: #{tpu_custom_call.1} parent=11 // pred_check_branch
          %258 = sbr.rel (%p256) target = $region16
        $region15: #{tpu_custom_call.1} parent=11 // pred_region
          _
        $region16: #{tpu_custom_call.1} parent=11 // pred_fallthru
          _
        // Predicated region
        $region17: #{tpu_custom_call.1} parent=11 // pred_check
          %p259 = pneg %p110
        $region18: #{tpu_custom_call.1} parent=11 // pred_check_branch
          %261 = sbr.rel (%p259) target = $region20
        $region19: #{tpu_custom_call.1} parent=11 // pred_region
          _
        $region20: #{tpu_custom_call.1} parent=11 // pred_fallthru
          _
        // Predicated region
        $region21: #{tpu_custom_call.1} parent=11 // pred_check
          %p262 = pneg %p131
        $region22: #{tpu_custom_call.1} parent=11 // pred_check_branch
          %264 = sbr.rel (%p262) target = $region24
        $region23: #{tpu_custom_call.1} parent=11 // pred_region
          _
        $region24: #{tpu_custom_call.1} parent=11 // pred_fallthru
          _
        // Predicated region
        $region25: #{tpu_custom_call.1} parent=11 // pred_check
          %p265 = pneg %p152
        $region26: #{tpu_custom_call.1} parent=11 // pred_check_branch
          %267 = sbr.rel (%p265) target = $region28
        $region27: #{tpu_custom_call.1} parent=11 // pred_region
          %s269 = ssub.s32 12288, 12288
          %270 = vsyncadd [#allocation3], %s269
          %s271 = sshll.u32 [#allocation2], 4
          %s272 = int_to_ptr.vmem [resolvable:$true] %s271
          %277 = dma.hbm_to_vmem [thread:$0]  %s5, 12288, %s272, [#allocation3], 192, 192, 12
        $region28: #{tpu_custom_call.1} parent=11 // pred_fallthru
          _
        // Predicated region
        $region29: #{tpu_custom_call.1} parent=11 // pred_check
          %p278 = pneg %p173
        $region30: #{tpu_custom_call.1} parent=11 // pred_check_branch
          %280 = sbr.rel (%p278) target = $region32
        $region31: #{tpu_custom_call.1} parent=11 // pred_region
          _
        $region32: #{tpu_custom_call.1} parent=11 // pred_fallthru
          _
        // Predicated region
        $region33: #{tpu_custom_call.1} parent=11 // pred_check
          %p281 = pneg %p194
        $region34: #{tpu_custom_call.1} parent=11 // pred_check_branch
          %283 = sbr.rel (%p281) target = $region36
        $region35: #{tpu_custom_call.1} parent=11 // pred_region
          _
        $region36: #{tpu_custom_call.1} parent=11 // pred_fallthru
          _
        // Predicated region
        $region37: #{tpu_custom_call.1} parent=11 // pred_check
          %p284 = pneg %p215
        $region38: #{tpu_custom_call.1} parent=11 // pred_check_branch
          %286 = sbr.rel (%p284) target = $region40
        $region39: #{tpu_custom_call.1} parent=11 // pred_region
          _
        $region40: #{tpu_custom_call.1} parent=11 // pred_fallthru
          _
      $region12: #{tpu_custom_call.1} parent=5 // pred_fallthru
        _
      %p287 = scmp.lt.s32.totalorder %s16, 2
      // Predicated region
      $region41: #{tpu_custom_call.1} parent=5 // pred_check
        %p288 = pneg %p287
      $region42: #{tpu_custom_call.1} parent=5 // pred_check_branch
        %290 = sbr.rel (%p288) target = $region44
      $region43: #{tpu_custom_call.1} parent=5 // pred_region
        // Predicated region
        $region45: #{tpu_custom_call.1} parent=43 // pred_check
          %p291 = pneg %p36
        $region46: #{tpu_custom_call.1} parent=43 // pred_check_branch
          %293 = sbr.rel (%p291) target = $region48
        $region47: #{tpu_custom_call.1} parent=43 // pred_region
          %s294 = smul.u32 4, %s16
          %p295 = scmp.lt.s32.totalorder %s294, 7
          %s296 = scalar_select %p295, %s294, 7
          %s297 = smul.addr %s296, 8
          %s298 = scalar_lea.vmem %s0, %s297
          %s299 = smul.u32 4, %s16
        $region48: #{tpu_custom_call.1} parent=43 // pred_fallthru
          _
        // Predicated region
        $region49: #{tpu_custom_call.1} parent=43 // pred_check
          %p300 = pneg %p62
        $region50: #{tpu_custom_call.1} parent=43 // pred_check_branch
          %302 = sbr.rel (%p300) target = $region52
        $region51: #{tpu_custom_call.1} parent=43 // pred_region
          %s303 = smul.u32 4, %s16
          %p304 = scmp.lt.s32.totalorder %s303, 7
          %s305 = scalar_select %p304, %s303, 7
          %s306 = smul.addr %s305, 8
          %s307 = scalar_lea.vmem %s1, %s306
          %s308 = smul.u32 4, %s16
        $region52: #{tpu_custom_call.1} parent=43 // pred_fallthru
          _
      $region44: #{tpu_custom_call.1} parent=5 // pred_fallthru
        _
      %p309 = scmp.le.s32.totalorder 1, %s16
      %p310 = scmp.lt.s32.totalorder %s16, 3
      %p311 = pnand %p309, %p310
      %p312 = pneg %p311
      // Predicated region
      $region53: #{tpu_custom_call.1} parent=5 // pred_check
        _
      $region54: #{tpu_custom_call.1} parent=5 // pred_check_branch
        %314 = sbr.rel (%p311) target = $region56
      $region55: #{tpu_custom_call.1} parent=5 // pred_region
        %s315 = ssub.s32 %s16, 1
        // Predicated region
        $region57: #{tpu_custom_call.1} parent=55 // pred_check
          %p316 = pneg %p152
        $region58: #{tpu_custom_call.1} parent=55 // pred_check_branch
          %318 = sbr.rel (%p316) target = $region60
        $region59: #{tpu_custom_call.1} parent=55 // pred_region
          %319 = dma.done [#allocation3], 12288
        $region60: #{tpu_custom_call.1} parent=55 // pred_fallthru
          _
        %s320 = smul.u32 4, %s21
        %p321 = scmp.lt.s32.totalorder %s320, 7
        %s322 = scalar_select %p321, %s320, 7
        %s323 = smul.addr %s322, 8
        %s324 = scalar_lea.vmem %s0, %s323
        %p325 = pneg %p42
        %p326 = pneg %p39
        %s327 = smul.u32 4, %s21
        %p328 = scmp.lt.s32.totalorder %s327, 7
        %s329 = scalar_select %p328, %s327, 7
        %s330 = smul.addr %s329, 8
        %s331 = scalar_lea.vmem %s1, %s330
        %p332 = pneg %p68
        %p333 = pneg %p65
        %p334 = pneg %p89
        %p335 = pneg %p86
        %p336 = pneg %p110
        %p337 = pneg %p107
        %p338 = pneg %p131
        %p339 = pneg %p128
        %p340 = pneg %p152
        %p341 = pneg %p149
        %p342 = pneg %p173
        %p343 = pneg %p170
        %p344 = pneg %p194
        %p345 = pneg %p191
        %p346 = pneg %p215
        %p347 = pneg %p212
        %p348 = pneg %p241
        %p349 = pneg %p238
        %s350 = smul.u32 4, %s21
        %p351 = scmp.lt.s32.totalorder %s350, 7
        %s352 = scalar_select %p351, %s350, 7
        %s353 = smul.addr %s352, 8
        %s354 = scalar_lea.vmem %s9, %s353
        %s355 = smul.u32 4, %s21
        %p356 = scmp.lt.s32.totalorder %s355, 7
        %s357 = scalar_select %p356, %s355, 7
        %s358 = smul.addr %s357, 8
        %s359 = scalar_lea.vmem %s0, %s358
        %s360 = smul.u32 4, %s21
        %s361 = smul.u32 4, %s21
        %p362 = scmp.lt.s32.totalorder %s361, 7
        %s363 = scalar_select %p362, %s361, 7
        %s364 = smul.addr %s363, 8
        %s365 = scalar_lea.vmem %s1, %s364
        %s366 = smul.u32 4, %s21
        %s367 = smul.u32 4, %s21
        %p368 = scmp.lt.s32.totalorder %s367, 7
        %s369 = scalar_select %p368, %s367, 7
        %s370 = smul.addr %s369, 8
        %s371 = scalar_lea.vmem %s9, %s370
        %s372 = smul.u32 4, %s21
        %v374 = vld [vmem:[%s365] sm:$0xff]
        %v375 = vld [vmem:[%s365 + $0x8] sm:$0xff]
        %v376 = vld [vmem:[%s365 + $0x10] sm:$0xff]
        %v377 = vld [vmem:[%s365 + $0x18] sm:$0xff]
        %v378 = vld [vmem:[%s359] sm:$0xff]
        %v379 = vld [vmem:[%s359 + $0x8] sm:$0xff]
        %v380 = vld [vmem:[%s359 + $0x10] sm:$0xff]
        %v381 = vld [vmem:[%s359 + $0x18] sm:$0xff]
        %v382 = vpack.c.bf16 %v379, %v378
        %v383 = vpack.c.bf16 %v381, %v380
        %v384 = vld [vmem:[%s2] sm:$0xff]
        %v385 = vld [vmem:[%s2 + $0x8] sm:$0xff]
        %v386 = vld [vmem:[%s2 + $0x10] sm:$0xff]
        %v387 = vld [vmem:[%s2 + $0x18] sm:$0xff]
        %v388 = vld [vmem:[%s2 + $0x20] sm:$0x11]
        %v389 = vld [vmem:[%s2 + $0x28] sm:$0x11]
        %v390 = vpack.c.bf16 %v375, %v374
        %v391 = vpack.c.bf16 %v377, %v376
        %v392 = vld [vmem:[%s3] sm:$0x77]
        %v393 = vld [vmem:[%s3 + $0x8] sm:$0x77]
        %v396 = vunpack.c.l.b16 %v392
        %v397 = vunpack.c.h.b16 %v392
        %v398 = vunpack.c.l.b16 %v393
        %v399 = vunpack.c.h.b16 %v393
        %v400 = vpack.c.b16 %v396, %v396
        %v401 = vpack.c.b16 %v397, %v397
        %v402 = vpack.c.b16 %v398, %v398
        %v403 = vpack.c.b16 %v399, %v399
        %vm404 = vcmask 48128
        %v406 = vsel %vm404, %v390, 0
        %v409 = vsel %vm404, %v391, 0
        %vm411 = vcmask 1042432
        %v413 = vsel %vm411, %v400, 0
        %v416 = vsel %vm411, %v401, 0
        %v419 = vsel %vm411, %v402, 0
        %v422 = vsel %vm411, %v403, 0
        %424 = vmatprep.subr.bf16.mxu0 0
        %425 = vmatpush1.bf16.msra.mxu0 0
        %426 = vmatprep.subr.bf16.mxu0 0
        %427 = vmatpush1.bf16.msra.mxu0 0
        %428 = vmatprep.subr.bf16.mxu0 0
        %429 = vmatpush1.bf16.msra.mxu0 0
        %430 = vmatprep.subr.bf16.mxu0 0
        %431 = vmatpush1.bf16.msra.mxu0 0
        %432 = vmatprep.subr.bf16.mxu0 0
        %433 = vmatpush1.bf16.msra.mxu0 0
        %434 = vmatprep.subr.bf16.mxu0 0
        %435 = vmatpush1.bf16.msra.mxu0 0
        %436 = vmatprep.subr.bf16.mxu0 0
        %437 = vmatpush1.bf16.msra.mxu0 0
        %438 = vmatprep.subr.bf16.mxu0 %v416
        %439 = vmatpush1.bf16.msra.mxu0 %v413
        %440 = vmatprep.subr.bf16.mxu0 0
        %441 = vmatpush2.bf16.msra.mxu0 0
        %442 = vmatprep.subr.bf16.mxu0 0
        %443 = vmatpush2.bf16.msra.mxu0 0
        %444 = vmatprep.subr.bf16.mxu0 0
        %445 = vmatpush2.bf16.msra.mxu0 0
        %446 = vmatprep.subr.bf16.mxu0 0
        %447 = vmatpush2.bf16.msra.mxu0 0
        %448 = vmatprep.subr.bf16.mxu0 0
        %449 = vmatpush2.bf16.msra.mxu0 0
        %450 = vmatprep.subr.bf16.mxu0 0
        %451 = vmatpush2.bf16.msra.mxu0 0
        %452 = vmatprep.subr.bf16.mxu0 0
        %453 = vmatpush2.bf16.msra.mxu0 0
        %454 = vmatprep.subr.bf16.mxu0 0
        %455 = vmatpush2.bf16.msra.mxu0 0
        %456 = vmatprep.mubr.bf16.mxu0 0
        %457 = vmatmul.mubr.bf16.gmra.mxu0 %v406
        %v458 = vpop.f32.mrf.mxu0
        %v459 = vadd.f32 0.0, %v458
        %v460 = vpop.f32.mrf.mxu0
        %v461 = vadd.f32 0.0, %v460
        %v462 = vpop.f32.mrf.mxu0
        %v463 = vadd.f32 0.0, %v462
        %v464 = vpop.f32.mrf.mxu0
        %v465 = vadd.f32 0.0, %v464
        %466 = vmatprep.mubr.bf16.mxu0 0
        %467 = vmatmul.mubr.bf16.gmra.mxu0 %v409
        %v468 = vpop.f32.mrf.mxu0
        %v469 = vadd.f32 0.0, %v468
        %v470 = vpop.f32.mrf.mxu0
        %v471 = vadd.f32 0.0, %v470
        %v472 = vpop.f32.mrf.mxu0
        %v473 = vadd.f32 0.0, %v472
        %v474 = vpop.f32.mrf.mxu0
        %v475 = vadd.f32 0.0, %v474
        %476 = vdwg.mxu0
        %477 = vmatprep.subr.bf16.mxu0 0
        %478 = vmatpush1.bf16.msra.mxu0 0
        %479 = vmatprep.subr.bf16.mxu0 0
        %480 = vmatpush1.bf16.msra.mxu0 0
        %481 = vmatprep.subr.bf16.mxu0 0
        %482 = vmatpush1.bf16.msra.mxu0 0
        %483 = vmatprep.subr.bf16.mxu0 0
        %484 = vmatpush1.bf16.msra.mxu0 0
        %485 = vmatprep.subr.bf16.mxu0 0
        %486 = vmatpush1.bf16.msra.mxu0 0
        %487 = vmatprep.subr.bf16.mxu0 0
        %488 = vmatpush1.bf16.msra.mxu0 0
        %489 = vmatprep.subr.bf16.mxu0 0
        %490 = vmatpush1.bf16.msra.mxu0 0
        %491 = vmatprep.subr.bf16.mxu0 %v422
        %492 = vmatpush1.bf16.msra.mxu0 %v419
        %493 = vmatprep.subr.bf16.mxu0 0
        %494 = vmatpush2.bf16.msra.mxu0 0
        %495 = vmatprep.subr.bf16.mxu0 0
        %496 = vmatpush2.bf16.msra.mxu0 0
        %497 = vmatprep.subr.bf16.mxu0 0
        %498 = vmatpush2.bf16.msra.mxu0 0
        %499 = vmatprep.subr.bf16.mxu0 0
        %500 = vmatpush2.bf16.msra.mxu0 0
        %501 = vmatprep.subr.bf16.mxu0 0
        %502 = vmatpush2.bf16.msra.mxu0 0
        %503 = vmatprep.subr.bf16.mxu0 0
        %504 = vmatpush2.bf16.msra.mxu0 0
        %505 = vmatprep.subr.bf16.mxu0 0
        %506 = vmatpush2.bf16.msra.mxu0 0
        %507 = vmatprep.subr.bf16.mxu0 0
        %508 = vmatpush2.bf16.msra.mxu0 0
        %509 = vmatprep.mubr.bf16.mxu0 0
        %510 = vmatmul.mubr.bf16.gmra.mxu0 %v406
        %v511 = vpop.f32.mrf.mxu0
        %v512 = vadd.f32 0.0, %v511
        %v513 = vpop.f32.mrf.mxu0
        %v514 = vadd.f32 0.0, %v513
        %v515 = vpop.f32.mrf.mxu0
        %v516 = vadd.f32 0.0, %v515
        %v517 = vpop.f32.mrf.mxu0
        %v518 = vadd.f32 0.0, %v517
        %519 = vmatprep.mubr.bf16.mxu0 0
        %520 = vmatmul.mubr.bf16.gmra.mxu0 %v409
        %v521 = vpop.f32.mrf.mxu0
        %v522 = vadd.f32 0.0, %v521
        %v523 = vpop.f32.mrf.mxu0
        %v524 = vadd.f32 0.0, %v523
        %v525 = vpop.f32.mrf.mxu0
        %v526 = vadd.f32 0.0, %v525
        %v527 = vpop.f32.mrf.mxu0
        %v528 = vadd.f32 0.0, %v527
        %529 = vdwg.mxu0
        %v536 = vunpack.c.l.b16 %v384
        %v537 = vunpack.c.h.b16 %v384
        %v538 = vunpack.c.l.b16 %v385
        %v539 = vunpack.c.h.b16 %v385
        %v540 = vunpack.c.l.b16 %v386
        %v541 = vunpack.c.h.b16 %v386
        %v542 = vunpack.c.l.b16 %v387
        %v543 = vunpack.c.h.b16 %v387
        %v544 = vunpack.c.l.b16 %v388
        %v545 = vunpack.c.h.b16 %v388
        %v546 = vunpack.c.l.b16 %v389
        %v547 = vunpack.c.h.b16 %v389
        %v548 = vpack.c.b16 %v540, %v536
        %v549 = vpack.c.b16 %v541, %v537
        %v550 = vpack.c.b16 %v542, %v538
        %v551 = vpack.c.b16 %v543, %v539
        %v552 = vpack.c.b16 %v544, %v544
        %v553 = vpack.c.b16 %v545, %v545
        %v554 = vpack.c.b16 %v546, %v546
        %v555 = vpack.c.b16 %v547, %v547
        %vm560 = vcmask 138240
        %v562 = vsel %vm560, %v382, 0
        %v565 = vsel %vm560, %v383, 0
        %vm567 = vcmask 1040384
        %v568 = vsel 0, 4294967295, 65535
        %v569 = vsel %vm567, %v568, 0
        %v571 = vand.u32 %v552, %v569
        %v574 = vand.u32 %v553, %v569
        %v577 = vand.u32 %v554, %v569
        %v580 = vand.u32 %v555, %v569
        %582 = vmatprep.subr.bf16.mxu0 0
        %583 = vmatpush1.bf16.msra.mxu0 0
        %584 = vmatprep.subr.bf16.mxu0 0
        %585 = vmatpush1.bf16.msra.mxu0 0
        %586 = vmatprep.subr.bf16.mxu0 0
        %587 = vmatpush1.bf16.msra.mxu0 0
        %588 = vmatprep.subr.bf16.mxu0 0
        %589 = vmatpush1.bf16.msra.mxu0 0
        %590 = vmatprep.subr.bf16.mxu0 0
        %591 = vmatpush1.bf16.msra.mxu0 0
        %592 = vmatprep.subr.bf16.mxu0 0
        %593 = vmatpush1.bf16.msra.mxu0 0
        %594 = vmatprep.subr.bf16.mxu0 %v574
        %595 = vmatpush1.bf16.msra.mxu0 %v571
        %596 = vmatprep.subr.bf16.mxu0 %v549
        %597 = vmatpush1.bf16.msra.mxu0 %v548
        %598 = vmatprep.subr.bf16.mxu0 0
        %599 = vmatpush2.bf16.msra.mxu0 0
        %600 = vmatprep.subr.bf16.mxu0 0
        %601 = vmatpush2.bf16.msra.mxu0 0
        %602 = vmatprep.subr.bf16.mxu0 0
        %603 = vmatpush2.bf16.msra.mxu0 0
        %604 = vmatprep.subr.bf16.mxu0 0
        %605 = vmatpush2.bf16.msra.mxu0 0
        %606 = vmatprep.subr.bf16.mxu0 0
        %607 = vmatpush2.bf16.msra.mxu0 0
        %608 = vmatprep.subr.bf16.mxu0 0
        %609 = vmatpush2.bf16.msra.mxu0 0
        %610 = vmatprep.subr.bf16.mxu0 0
        %611 = vmatpush2.bf16.msra.mxu0 0
        %612 = vmatprep.subr.bf16.mxu0 0
        %613 = vmatpush2.bf16.msra.mxu0 0
        %614 = vmatprep.mubr.bf16.mxu0 0
        %615 = vmatmul.mubr.bf16.gmra.mxu0 %v562
        %v616 = vpop.f32.mrf.mxu0
        %v617 = vadd.f32 %v459, %v616
        %v618 = vpop.f32.mrf.mxu0
        %v619 = vadd.f32 %v461, %v618
        %v620 = vpop.f32.mrf.mxu0
        %v621 = vadd.f32 %v463, %v620
        %v622 = vpop.f32.mrf.mxu0
        %v623 = vadd.f32 %v465, %v622
        %624 = vmatprep.mubr.bf16.mxu0 0
        %625 = vmatmul.mubr.bf16.gmra.mxu0 %v565
        %v626 = vpop.f32.mrf.mxu0
        %v627 = vadd.f32 %v469, %v626
        %v628 = vpop.f32.mrf.mxu0
        %v629 = vadd.f32 %v471, %v628
        %v630 = vpop.f32.mrf.mxu0
        %v631 = vadd.f32 %v473, %v630
        %v632 = vpop.f32.mrf.mxu0
        %v633 = vadd.f32 %v475, %v632
        %634 = vdwg.mxu0
        %635 = vmatprep.subr.bf16.mxu0 0
        %636 = vmatpush1.bf16.msra.mxu0 0
        %637 = vmatprep.subr.bf16.mxu0 0
        %638 = vmatpush1.bf16.msra.mxu0 0
        %639 = vmatprep.subr.bf16.mxu0 0
        %640 = vmatpush1.bf16.msra.mxu0 0
        %641 = vmatprep.subr.bf16.mxu0 0
        %642 = vmatpush1.bf16.msra.mxu0 0
        %643 = vmatprep.subr.bf16.mxu0 0
        %644 = vmatpush1.bf16.msra.mxu0 0
        %645 = vmatprep.subr.bf16.mxu0 0
        %646 = vmatpush1.bf16.msra.mxu0 0
        %647 = vmatprep.subr.bf16.mxu0 %v580
        %648 = vmatpush1.bf16.msra.mxu0 %v577
        %649 = vmatprep.subr.bf16.mxu0 %v551
        %650 = vmatpush1.bf16.msra.mxu0 %v550
        %651 = vmatprep.subr.bf16.mxu0 0
        %652 = vmatpush2.bf16.msra.mxu0 0
        %653 = vmatprep.subr.bf16.mxu0 0
        %654 = vmatpush2.bf16.msra.mxu0 0
        %655 = vmatprep.subr.bf16.mxu0 0
        %656 = vmatpush2.bf16.msra.mxu0 0
        %657 = vmatprep.subr.bf16.mxu0 0
        %658 = vmatpush2.bf16.msra.mxu0 0
        %659 = vmatprep.subr.bf16.mxu0 0
        %660 = vmatpush2.bf16.msra.mxu0 0
        %661 = vmatprep.subr.bf16.mxu0 0
        %662 = vmatpush2.bf16.msra.mxu0 0
        %663 = vmatprep.subr.bf16.mxu0 0
        %664 = vmatpush2.bf16.msra.mxu0 0
        %665 = vmatprep.subr.bf16.mxu0 0
        %666 = vmatpush2.bf16.msra.mxu0 0
        %667 = vmatprep.mubr.bf16.mxu0 0
        %668 = vmatmul.mubr.bf16.gmra.mxu0 %v562
        %v669 = vpop.f32.mrf.mxu0
        %v670 = vadd.f32 %v512, %v669
        %v671 = vpop.f32.mrf.mxu0
        %v672 = vadd.f32 %v514, %v671
        %v673 = vpop.f32.mrf.mxu0
        %v674 = vadd.f32 %v516, %v673
        %v675 = vpop.f32.mrf.mxu0
        %v676 = vadd.f32 %v518, %v675
        %677 = vmatprep.mubr.bf16.mxu0 0
        %678 = vmatmul.mubr.bf16.gmra.mxu0 %v565
        %v679 = vpop.f32.mrf.mxu0
        %v680 = vadd.f32 %v522, %v679
        %v681 = vpop.f32.mrf.mxu0
        %v682 = vadd.f32 %v524, %v681
        %v683 = vpop.f32.mrf.mxu0
        %v684 = vadd.f32 %v526, %v683
        %v685 = vpop.f32.mrf.mxu0
        %v686 = vadd.f32 %v528, %v685
        %687 = vdwg.mxu0
        %v688 = vld [vmem:[%s4] sm:$0xf]
        %v690 = vlaneseq
        %v691 = vshrl.u32 %v690, 7
        %v692 = vsub.s32 0, %v691
        %v693 = vrot.slane %v688, %v692
        %v694 = vlaneseq
        %v695 = vshrl.u32 %v694, 7
        %v696 = vsub.s32 1, %v695
        %v697 = vrot.slane %v688, %v696
        %v698 = vlaneseq
        %v699 = vshrl.u32 %v698, 7
        %v700 = vsub.s32 2, %v699
        %v701 = vrot.slane %v688, %v700
        %v702 = vlaneseq
        %v703 = vshrl.u32 %v702, 7
        %v704 = vsub.s32 3, %v703
        %v705 = vrot.slane %v688, %v704
        %v710 = vadd.f32 %v617, %v693
        %v711 = vadd.f32 %v619, %v697
        %v712 = vadd.f32 %v670, %v701
        %v713 = vadd.f32 %v672, %v705
        %v714 = vadd.f32 %v621, %v693
        %v715 = vadd.f32 %v623, %v697
        %v716 = vadd.f32 %v674, %v701
        %v717 = vadd.f32 %v676, %v705
        %v718 = vadd.f32 %v627, %v693
        %v719 = vadd.f32 %v629, %v697
        %v720 = vadd.f32 %v680, %v701
        %v721 = vadd.f32 %v682, %v705
        %v722 = vadd.f32 %v631, %v693
        %v723 = vadd.f32 %v633, %v697
        %v724 = vadd.f32 %v684, %v701
        %v725 = vadd.f32 %v686, %v705
        %v726 = vmax.f32 %v710, 0.0
        %v727 = vmax.f32 %v711, 0.0
        %v728 = vmax.f32 %v712, 0.0
        %v729 = vmax.f32 %v713, 0.0
        %v730 = vmax.f32 %v714, 0.0
        %v731 = vmax.f32 %v715, 0.0
        %v732 = vmax.f32 %v716, 0.0
        %v733 = vmax.f32 %v717, 0.0
        %v734 = vmax.f32 %v718, 0.0
        %v735 = vmax.f32 %v719, 0.0
        %v736 = vmax.f32 %v720, 0.0
        %v737 = vmax.f32 %v721, 0.0
        %v738 = vmax.f32 %v722, 0.0
        %v739 = vmax.f32 %v723, 0.0
        %v740 = vmax.f32 %v724, 0.0
        %v741 = vmax.f32 %v725, 0.0
        %v742 = vpack.c.bf16 %v730, %v726
        %v743 = vpack.c.bf16 %v731, %v727
        %v744 = vpack.c.bf16 %v732, %v728
        %v745 = vpack.c.bf16 %v733, %v729
        %v746 = vpack.c.bf16 %v738, %v734
        %v747 = vpack.c.bf16 %v739, %v735
        %v748 = vpack.c.bf16 %v740, %v736
        %v749 = vpack.c.bf16 %v741, %v737
        %v750 = vld [vmem:[#allocation2] sm:$0xff]
        %v751 = vld [vmem:[#allocation2 + $0x8] sm:$0xf]
        %v752 = vld [vmem:[#allocation2 + $0xc] sm:$0xff]
        %v753 = vld [vmem:[#allocation2 + $0x14] sm:$0xf]
        %v754 = vld [vmem:[#allocation2 + $0x18] sm:$0xff]
        %v755 = vld [vmem:[#allocation2 + $0x20] sm:$0xf]
        %v756 = vld [vmem:[#allocation2 + $0x24] sm:$0xff]
        %v757 = vld [vmem:[#allocation2 + $0x2c] sm:$0xf]
        %v758 = vld [vmem:[#allocation2 + $0x30] sm:$0xff]
        %v759 = vld [vmem:[#allocation2 + $0x38] sm:$0xf]
        %v760 = vld [vmem:[#allocation2 + $0x3c] sm:$0xff]
        %v761 = vld [vmem:[#allocation2 + $0x44] sm:$0xf]
        %v762 = vld [vmem:[#allocation2 + $0x48] sm:$0xff]
        %v763 = vld [vmem:[#allocation2 + $0x50] sm:$0xf]
        %v764 = vld [vmem:[#allocation2 + $0x54] sm:$0xff]
        %v765 = vld [vmem:[#allocation2 + $0x5c] sm:$0xf]
        %v766 = vld [vmem:[#allocation2 + $0x60] sm:$0xff]
        %v767 = vld [vmem:[#allocation2 + $0x68] sm:$0xf]
        %v768 = vld [vmem:[#allocation2 + $0x6c] sm:$0xff]
        %v769 = vld [vmem:[#allocation2 + $0x74] sm:$0xf]
        %v770 = vld [vmem:[#allocation2 + $0x78] sm:$0xff]
        %v771 = vld [vmem:[#allocation2 + $0x80] sm:$0xf]
        %v772 = vld [vmem:[#allocation2 + $0x84] sm:$0xff]
        %v773 = vld [vmem:[#allocation2 + $0x8c] sm:$0xf]
        %v774 = vld [vmem:[#allocation2 + $0x90] sm:$0xff]
        %v775 = vld [vmem:[#allocation2 + $0x98] sm:$0xf]
        %v776 = vld [vmem:[#allocation2 + $0x9c] sm:$0xff]
        %v777 = vld [vmem:[#allocation2 + $0xa4] sm:$0xf]
        %v778 = vld [vmem:[#allocation2 + $0xa8] sm:$0xff]
        %v779 = vld [vmem:[#allocation2 + $0xb0] sm:$0xf]
        %v780 = vld [vmem:[#allocation2 + $0xb4] sm:$0xff]
        %v781 = vld [vmem:[#allocation2 + $0xbc] sm:$0xf]
        %v782 = vld [vmem:[#allocation2 + $0xc0] sm:$0xff]
        %v783 = vld [vmem:[#allocation2 + $0xc8] sm:$0xf]
        %v784 = vld [vmem:[#allocation2 + $0xcc] sm:$0xff]
        %v785 = vld [vmem:[#allocation2 + $0xd4] sm:$0xf]
        %v786 = vld [vmem:[#allocation2 + $0xd8] sm:$0xff]
        %v787 = vld [vmem:[#allocation2 + $0xe0] sm:$0xf]
        %v788 = vld [vmem:[#allocation2 + $0xe4] sm:$0xff]
        %v789 = vld [vmem:[#allocation2 + $0xec] sm:$0xf]
        %v790 = vld [vmem:[#allocation2 + $0xf0] sm:$0xff]
        %v791 = vld [vmem:[#allocation2 + $0xf8] sm:$0xf]
        %v792 = vld [vmem:[#allocation2 + $0xfc] sm:$0xff]
        %v793 = vld [vmem:[#allocation2 + $0x104] sm:$0xf]
        %v794 = vld [vmem:[#allocation2 + $0x108] sm:$0xff]
        %v795 = vld [vmem:[#allocation2 + $0x110] sm:$0xf]
        %v796 = vld [vmem:[#allocation2 + $0x114] sm:$0xff]
        %v797 = vld [vmem:[#allocation2 + $0x11c] sm:$0xf]
        %v798 = vld [vmem:[#allocation2 + $0x120] sm:$0xff]
        %v799 = vld [vmem:[#allocation2 + $0x128] sm:$0xf]
        %v800 = vld [vmem:[#allocation2 + $0x12c] sm:$0xff]
        %v801 = vld [vmem:[#allocation2 + $0x134] sm:$0xf]
        %v802 = vld [vmem:[#allocation2 + $0x138] sm:$0xff]
        %v803 = vld [vmem:[#allocation2 + $0x140] sm:$0xf]
        %v804 = vld [vmem:[#allocation2 + $0x144] sm:$0xff]
        %v805 = vld [vmem:[#allocation2 + $0x14c] sm:$0xf]
        %v806 = vld [vmem:[#allocation2 + $0x150] sm:$0xff]
        %v807 = vld [vmem:[#allocation2 + $0x158] sm:$0xf]
        %v808 = vld [vmem:[#allocation2 + $0x15c] sm:$0xff]
        %v809 = vld [vmem:[#allocation2 + $0x164] sm:$0xf]
        %v810 = vld [vmem:[#allocation2 + $0x168] sm:$0xff]
        %v811 = vld [vmem:[#allocation2 + $0x170] sm:$0xf]
        %v812 = vld [vmem:[#allocation2 + $0x174] sm:$0xff]
        %v813 = vld [vmem:[#allocation2 + $0x17c] sm:$0xf]
        %v814 = vld [vmem:[#allocation2 + $0x180] sm:$0xff]
        %v815 = vld [vmem:[#allocation2 + $0x188] sm:$0xf]
        %v816 = vld [vmem:[#allocation2 + $0x18c] sm:$0xff]
        %v817 = vld [vmem:[#allocation2 + $0x194] sm:$0xf]
        %v818 = vld [vmem:[#allocation2 + $0x198] sm:$0xff]
        %v819 = vld [vmem:[#allocation2 + $0x1a0] sm:$0xf]
        %v820 = vld [vmem:[#allocation2 + $0x1a4] sm:$0xff]
        %v821 = vld [vmem:[#allocation2 + $0x1ac] sm:$0xf]
        %v822 = vld [vmem:[#allocation2 + $0x1b0] sm:$0xff]
        %v823 = vld [vmem:[#allocation2 + $0x1b8] sm:$0xf]
        %v824 = vld [vmem:[#allocation2 + $0x1bc] sm:$0xff]
        %v825 = vld [vmem:[#allocation2 + $0x1c4] sm:$0xf]
        %v826 = vld [vmem:[#allocation2 + $0x1c8] sm:$0xff]
        %v827 = vld [vmem:[#allocation2 + $0x1d0] sm:$0xf]
        %v828 = vld [vmem:[#allocation2 + $0x1d4] sm:$0xff]
        %v829 = vld [vmem:[#allocation2 + $0x1dc] sm:$0xf]
        %v830 = vld [vmem:[#allocation2 + $0x1e0] sm:$0xff]
        %v831 = vld [vmem:[#allocation2 + $0x1e8] sm:$0xf]
        %v832 = vld [vmem:[#allocation2 + $0x1ec] sm:$0xff]
        %v833 = vld [vmem:[#allocation2 + $0x1f4] sm:$0xf]
        %v834 = vld [vmem:[#allocation2 + $0x1f8] sm:$0xff]
        %v835 = vld [vmem:[#allocation2 + $0x200] sm:$0xf]
        %v836 = vld [vmem:[#allocation2 + $0x204] sm:$0xff]
        %v837 = vld [vmem:[#allocation2 + $0x20c] sm:$0xf]
        %v838 = vld [vmem:[#allocation2 + $0x210] sm:$0xff]
        %v839 = vld [vmem:[#allocation2 + $0x218] sm:$0xf]
        %v840 = vld [vmem:[#allocation2 + $0x21c] sm:$0xff]
        %v841 = vld [vmem:[#allocation2 + $0x224] sm:$0xf]
        %v842 = vld [vmem:[#allocation2 + $0x228] sm:$0xff]
        %v843 = vld [vmem:[#allocation2 + $0x230] sm:$0xf]
        %v844 = vld [vmem:[#allocation2 + $0x234] sm:$0xff]
        %v845 = vld [vmem:[#allocation2 + $0x23c] sm:$0xf]
        %v846 = vld [vmem:[#allocation2 + $0x240] sm:$0xff]
        %v847 = vld [vmem:[#allocation2 + $0x248] sm:$0xf]
        %v848 = vld [vmem:[#allocation2 + $0x24c] sm:$0xff]
        %v849 = vld [vmem:[#allocation2 + $0x254] sm:$0xf]
        %v850 = vld [vmem:[#allocation2 + $0x258] sm:$0xff]
        %v851 = vld [vmem:[#allocation2 + $0x260] sm:$0xf]
        %v852 = vld [vmem:[#allocation2 + $0x264] sm:$0xff]
        %v853 = vld [vmem:[#allocation2 + $0x26c] sm:$0xf]
        %v854 = vld [vmem:[#allocation2 + $0x270] sm:$0xff]
        %v855 = vld [vmem:[#allocation2 + $0x278] sm:$0xf]
        %v856 = vld [vmem:[#allocation2 + $0x27c] sm:$0xff]
        %v857 = vld [vmem:[#allocation2 + $0x284] sm:$0xf]
        %v858 = vld [vmem:[#allocation2 + $0x288] sm:$0xff]
        %v859 = vld [vmem:[#allocation2 + $0x290] sm:$0xf]
        %v860 = vld [vmem:[#allocation2 + $0x294] sm:$0xff]
        %v861 = vld [vmem:[#allocation2 + $0x29c] sm:$0xf]
        %v862 = vld [vmem:[#allocation2 + $0x2a0] sm:$0xff]
        %v863 = vld [vmem:[#allocation2 + $0x2a8] sm:$0xf]
        %v864 = vld [vmem:[#allocation2 + $0x2ac] sm:$0xff]
        %v865 = vld [vmem:[#allocation2 + $0x2b4] sm:$0xf]
        %v866 = vld [vmem:[#allocation2 + $0x2b8] sm:$0xff]
        %v867 = vld [vmem:[#allocation2 + $0x2c0] sm:$0xf]
        %v868 = vld [vmem:[#allocation2 + $0x2c4] sm:$0xff]
        %v869 = vld [vmem:[#allocation2 + $0x2cc] sm:$0xf]
        %v870 = vld [vmem:[#allocation2 + $0x2d0] sm:$0xff]
        %v871 = vld [vmem:[#allocation2 + $0x2d8] sm:$0xf]
        %v872 = vld [vmem:[#allocation2 + $0x2dc] sm:$0xff]
        %v873 = vld [vmem:[#allocation2 + $0x2e4] sm:$0xf]
        %v874 = vld [vmem:[#allocation2 + $0x2e8] sm:$0xff]
        %v875 = vld [vmem:[#allocation2 + $0x2f0] sm:$0xf]
        %v876 = vld [vmem:[#allocation2 + $0x2f4] sm:$0xff]
        %v877 = vld [vmem:[#allocation2 + $0x2fc] sm:$0xf]
        %v878 = vld [vmem:[%s6] sm:$0x7]
        %v880 = vlaneseq
        %v881 = vshrl.u32 %v880, 7
        %v882 = vsub.s32 0, %v881
        %v883 = vrot.slane %v878, %v882
        %v884 = vlaneseq
        %v885 = vshrl.u32 %v884, 7
        %v886 = vsub.s32 1, %v885
        %v887 = vrot.slane %v878, %v886
        %v888 = vlaneseq
        %v889 = vshrl.u32 %v888, 7
        %v890 = vsub.s32 2, %v889
        %v891 = vrot.slane %v878, %v890
        %v1023 = vunpack.c.l.b16 %v750
        %v1024 = vunpack.c.h.b16 %v750
        %v1025 = vunpack.c.l.b16 %v751
        %v1026 = vunpack.c.l.b16 %v752
        %v1027 = vunpack.c.h.b16 %v752
        %v1028 = vunpack.c.l.b16 %v753
        %v1029 = vunpack.c.l.b16 %v754
        %v1030 = vunpack.c.h.b16 %v754
        %v1031 = vunpack.c.l.b16 %v755
        %v1032 = vunpack.c.l.b16 %v756
        %v1033 = vunpack.c.h.b16 %v756
        %v1034 = vunpack.c.l.b16 %v757
        %v1035 = vunpack.c.l.b16 %v758
        %v1036 = vunpack.c.h.b16 %v758
        %v1037 = vunpack.c.l.b16 %v759
        %v1038 = vunpack.c.l.b16 %v760
        %v1039 = vunpack.c.h.b16 %v760
        %v1040 = vunpack.c.l.b16 %v761
        %v1041 = vunpack.c.l.b16 %v762
        %v1042 = vunpack.c.h.b16 %v762
        %v1043 = vunpack.c.l.b16 %v763
        %v1044 = vunpack.c.l.b16 %v764
        %v1045 = vunpack.c.h.b16 %v764
        %v1046 = vunpack.c.l.b16 %v765
        %v1047 = vunpack.c.l.b16 %v766
        %v1048 = vunpack.c.h.b16 %v766
        %v1049 = vunpack.c.l.b16 %v767
        %v1050 = vunpack.c.l.b16 %v768
        %v1051 = vunpack.c.h.b16 %v768
        %v1052 = vunpack.c.l.b16 %v769
        %v1053 = vunpack.c.l.b16 %v770
        %v1054 = vunpack.c.h.b16 %v770
        %v1055 = vunpack.c.l.b16 %v771
        %v1056 = vunpack.c.l.b16 %v772
        %v1057 = vunpack.c.h.b16 %v772
        %v1058 = vunpack.c.l.b16 %v773
        %v1059 = vunpack.c.l.b16 %v774
        %v1060 = vunpack.c.h.b16 %v774
        %v1061 = vunpack.c.l.b16 %v775
        %v1062 = vunpack.c.l.b16 %v776
        %v1063 = vunpack.c.h.b16 %v776
        %v1064 = vunpack.c.l.b16 %v777
        %v1065 = vunpack.c.l.b16 %v778
        %v1066 = vunpack.c.h.b16 %v778
        %v1067 = vunpack.c.l.b16 %v779
        %v1068 = vunpack.c.l.b16 %v780
        %v1069 = vunpack.c.h.b16 %v780
        %v1070 = vunpack.c.l.b16 %v781
        %v1071 = vunpack.c.l.b16 %v782
        %v1072 = vunpack.c.h.b16 %v782
        %v1073 = vunpack.c.l.b16 %v783
        %v1074 = vunpack.c.l.b16 %v784
        %v1075 = vunpack.c.h.b16 %v784
        %v1076 = vunpack.c.l.b16 %v785
        %v1077 = vunpack.c.l.b16 %v786
        %v1078 = vunpack.c.h.b16 %v786
        %v1079 = vunpack.c.l.b16 %v787
        %v1080 = vunpack.c.l.b16 %v788
        %v1081 = vunpack.c.h.b16 %v788
        %v1082 = vunpack.c.l.b16 %v789
        %v1083 = vunpack.c.l.b16 %v790
        %v1084 = vunpack.c.h.b16 %v790
        %v1085 = vunpack.c.l.b16 %v791
        %v1086 = vunpack.c.l.b16 %v792
        %v1087 = vunpack.c.h.b16 %v792
        %v1088 = vunpack.c.l.b16 %v793
        %v1089 = vunpack.c.l.b16 %v794
        %v1090 = vunpack.c.h.b16 %v794
        %v1091 = vunpack.c.l.b16 %v795
        %v1092 = vunpack.c.l.b16 %v796
        %v1093 = vunpack.c.h.b16 %v796
        %v1094 = vunpack.c.l.b16 %v797
        %v1095 = vunpack.c.l.b16 %v798
        %v1096 = vunpack.c.h.b16 %v798
        %v1097 = vunpack.c.l.b16 %v799
        %v1098 = vunpack.c.l.b16 %v800
        %v1099 = vunpack.c.h.b16 %v800
        %v1100 = vunpack.c.l.b16 %v801
        %v1101 = vunpack.c.l.b16 %v802
        %v1102 = vunpack.c.h.b16 %v802
        %v1103 = vunpack.c.l.b16 %v803
        %v1104 = vunpack.c.l.b16 %v804
        %v1105 = vunpack.c.h.b16 %v804
        %v1106 = vunpack.c.l.b16 %v805
        %v1107 = vunpack.c.l.b16 %v806
        %v1108 = vunpack.c.h.b16 %v806
        %v1109 = vunpack.c.l.b16 %v807
        %v1110 = vunpack.c.l.b16 %v808
        %v1111 = vunpack.c.h.b16 %v808
        %v1112 = vunpack.c.l.b16 %v809
        %v1113 = vunpack.c.l.b16 %v810
        %v1114 = vunpack.c.h.b16 %v810
        %v1115 = vunpack.c.l.b16 %v811
        %v1116 = vunpack.c.l.b16 %v812
        %v1117 = vunpack.c.h.b16 %v812
        %v1118 = vunpack.c.l.b16 %v813
        %v1119 = vunpack.c.l.b16 %v814
        %v1120 = vunpack.c.h.b16 %v814
        %v1121 = vunpack.c.l.b16 %v815
        %v1122 = vunpack.c.l.b16 %v816
        %v1123 = vunpack.c.h.b16 %v816
        %v1124 = vunpack.c.l.b16 %v817
        %v1125 = vunpack.c.l.b16 %v818
        %v1126 = vunpack.c.h.b16 %v818
        %v1127 = vunpack.c.l.b16 %v819
        %v1128 = vunpack.c.l.b16 %v820
        %v1129 = vunpack.c.h.b16 %v820
        %v1130 = vunpack.c.l.b16 %v821
        %v1131 = vunpack.c.l.b16 %v822
        %v1132 = vunpack.c.h.b16 %v822
        %v1133 = vunpack.c.l.b16 %v823
        %v1134 = vunpack.c.l.b16 %v824
        %v1135 = vunpack.c.h.b16 %v824
        %v1136 = vunpack.c.l.b16 %v825
        %v1137 = vunpack.c.l.b16 %v826
        %v1138 = vunpack.c.h.b16 %v826
        %v1139 = vunpack.c.l.b16 %v827
        %v1140 = vunpack.c.l.b16 %v828
        %v1141 = vunpack.c.h.b16 %v828
        %v1142 = vunpack.c.l.b16 %v829
        %v1143 = vunpack.c.l.b16 %v830
        %v1144 = vunpack.c.h.b16 %v830
        %v1145 = vunpack.c.l.b16 %v831
        %v1146 = vunpack.c.l.b16 %v832
        %v1147 = vunpack.c.h.b16 %v832
        %v1148 = vunpack.c.l.b16 %v833
        %v1149 = vunpack.c.l.b16 %v834
        %v1150 = vunpack.c.h.b16 %v834
        %v1151 = vunpack.c.l.b16 %v835
        %v1152 = vunpack.c.l.b16 %v836
        %v1153 = vunpack.c.h.b16 %v836
        %v1154 = vunpack.c.l.b16 %v837
        %v1155 = vunpack.c.l.b16 %v838
        %v1156 = vunpack.c.h.b16 %v838
        %v1157 = vunpack.c.l.b16 %v839
        %v1158 = vunpack.c.l.b16 %v840
        %v1159 = vunpack.c.h.b16 %v840
        %v1160 = vunpack.c.l.b16 %v841
        %v1161 = vunpack.c.l.b16 %v842
        %v1162 = vunpack.c.h.b16 %v842
        %v1163 = vunpack.c.l.b16 %v843
        %v1164 = vunpack.c.l.b16 %v844
        %v1165 = vunpack.c.h.b16 %v844
        %v1166 = vunpack.c.l.b16 %v845
        %v1167 = vunpack.c.l.b16 %v846
        %v1168 = vunpack.c.h.b16 %v846
        %v1169 = vunpack.c.l.b16 %v847
        %v1170 = vunpack.c.l.b16 %v848
        %v1171 = vunpack.c.h.b16 %v848
        %v1172 = vunpack.c.l.b16 %v849
        %v1173 = vunpack.c.l.b16 %v850
        %v1174 = vunpack.c.h.b16 %v850
        %v1175 = vunpack.c.l.b16 %v851
        %v1176 = vunpack.c.l.b16 %v852
        %v1177 = vunpack.c.h.b16 %v852
        %v1178 = vunpack.c.l.b16 %v853
        %v1179 = vunpack.c.l.b16 %v854
        %v1180 = vunpack.c.h.b16 %v854
        %v1181 = vunpack.c.l.b16 %v855
        %v1182 = vunpack.c.l.b16 %v856
        %v1183 = vunpack.c.h.b16 %v856
        %v1184 = vunpack.c.l.b16 %v857
        %v1185 = vunpack.c.l.b16 %v858
        %v1186 = vunpack.c.h.b16 %v858
        %v1187 = vunpack.c.l.b16 %v859
        %v1188 = vunpack.c.l.b16 %v860
        %v1189 = vunpack.c.h.b16 %v860
        %v1190 = vunpack.c.l.b16 %v861
        %v1191 = vunpack.c.l.b16 %v862
        %v1192 = vunpack.c.h.b16 %v862
        %v1193 = vunpack.c.l.b16 %v863
        %v1194 = vunpack.c.l.b16 %v864
        %v1195 = vunpack.c.h.b16 %v864
        %v1196 = vunpack.c.l.b16 %v865
        %v1197 = vunpack.c.l.b16 %v866
        %v1198 = vunpack.c.h.b16 %v866
        %v1199 = vunpack.c.l.b16 %v867
        %v1200 = vunpack.c.l.b16 %v868
        %v1201 = vunpack.c.h.b16 %v868
        %v1202 = vunpack.c.l.b16 %v869
        %v1203 = vunpack.c.l.b16 %v870
        %v1204 = vunpack.c.h.b16 %v870
        %v1205 = vunpack.c.l.b16 %v871
        %v1206 = vunpack.c.l.b16 %v872
        %v1207 = vunpack.c.h.b16 %v872
        %v1208 = vunpack.c.l.b16 %v873
        %v1209 = vunpack.c.l.b16 %v874
        %v1210 = vunpack.c.h.b16 %v874
        %v1211 = vunpack.c.l.b16 %v875
        %v1212 = vunpack.c.l.b16 %v876
        %v1213 = vunpack.c.h.b16 %v876
        %v1214 = vunpack.c.l.b16 %v877
        %v1215 = vpack.c.b16 %v1026, %v1023
        %v1216 = vpack.c.b16 %v1027, %v1024
        %v1217 = vpack.c.b16 %v1028, %v1025
        %v1218 = vpack.c.b16 %v1032, %v1029
        %v1219 = vpack.c.b16 %v1033, %v1030
        %v1220 = vpack.c.b16 %v1034, %v1031
        %v1221 = vpack.c.b16 %v1038, %v1035
        %v1222 = vpack.c.b16 %v1039, %v1036
        %v1223 = vpack.c.b16 %v1040, %v1037
        %v1224 = vpack.c.b16 %v1044, %v1041
        %v1225 = vpack.c.b16 %v1045, %v1042
        %v1226 = vpack.c.b16 %v1046, %v1043
        %v1227 = vpack.c.b16 %v1050, %v1047
        %v1228 = vpack.c.b16 %v1051, %v1048
        %v1229 = vpack.c.b16 %v1052, %v1049
        %v1230 = vpack.c.b16 %v1056, %v1053
        %v1231 = vpack.c.b16 %v1057, %v1054
        %v1232 = vpack.c.b16 %v1058, %v1055
        %v1233 = vpack.c.b16 %v1062, %v1059
        %v1234 = vpack.c.b16 %v1063, %v1060
        %v1235 = vpack.c.b16 %v1064, %v1061
        %v1236 = vpack.c.b16 %v1068, %v1065
        %v1237 = vpack.c.b16 %v1069, %v1066
        %v1238 = vpack.c.b16 %v1070, %v1067
        %v1239 = vpack.c.b16 %v1074, %v1071
        %v1240 = vpack.c.b16 %v1075, %v1072
        %v1241 = vpack.c.b16 %v1076, %v1073
        %v1242 = vpack.c.b16 %v1080, %v1077
        %v1243 = vpack.c.b16 %v1081, %v1078
        %v1244 = vpack.c.b16 %v1082, %v1079
        %v1245 = vpack.c.b16 %v1086, %v1083
        %v1246 = vpack.c.b16 %v1087, %v1084
        %v1247 = vpack.c.b16 %v1088, %v1085
        %v1248 = vpack.c.b16 %v1092, %v1089
        %v1249 = vpack.c.b16 %v1093, %v1090
        %v1250 = vpack.c.b16 %v1094, %v1091
        %v1251 = vpack.c.b16 %v1098, %v1095
        %v1252 = vpack.c.b16 %v1099, %v1096
        %v1253 = vpack.c.b16 %v1100, %v1097
        %v1254 = vpack.c.b16 %v1104, %v1101
        %v1255 = vpack.c.b16 %v1105, %v1102
        %v1256 = vpack.c.b16 %v1106, %v1103
        %v1257 = vpack.c.b16 %v1110, %v1107
        %v1258 = vpack.c.b16 %v1111, %v1108
        %v1259 = vpack.c.b16 %v1112, %v1109
        %v1260 = vpack.c.b16 %v1116, %v1113
        %v1261 = vpack.c.b16 %v1117, %v1114
        %v1262 = vpack.c.b16 %v1118, %v1115
        %v1263 = vpack.c.b16 %v1122, %v1119
        %v1264 = vpack.c.b16 %v1123, %v1120
        %v1265 = vpack.c.b16 %v1124, %v1121
        %v1266 = vpack.c.b16 %v1128, %v1125
        %v1267 = vpack.c.b16 %v1129, %v1126
        %v1268 = vpack.c.b16 %v1130, %v1127
        %v1269 = vpack.c.b16 %v1134, %v1131
        %v1270 = vpack.c.b16 %v1135, %v1132
        %v1271 = vpack.c.b16 %v1136, %v1133
        %v1272 = vpack.c.b16 %v1140, %v1137
        %v1273 = vpack.c.b16 %v1141, %v1138
        %v1274 = vpack.c.b16 %v1142, %v1139
        %v1275 = vpack.c.b16 %v1146, %v1143
        %v1276 = vpack.c.b16 %v1147, %v1144
        %v1277 = vpack.c.b16 %v1148, %v1145
        %v1278 = vpack.c.b16 %v1152, %v1149
        %v1279 = vpack.c.b16 %v1153, %v1150
        %v1280 = vpack.c.b16 %v1154, %v1151
        %v1281 = vpack.c.b16 %v1158, %v1155
        %v1282 = vpack.c.b16 %v1159, %v1156
        %v1283 = vpack.c.b16 %v1160, %v1157
        %v1284 = vpack.c.b16 %v1164, %v1161
        %v1285 = vpack.c.b16 %v1165, %v1162
        %v1286 = vpack.c.b16 %v1166, %v1163
        %v1287 = vpack.c.b16 %v1170, %v1167
        %v1288 = vpack.c.b16 %v1171, %v1168
        %v1289 = vpack.c.b16 %v1172, %v1169
        %v1290 = vpack.c.b16 %v1176, %v1173
        %v1291 = vpack.c.b16 %v1177, %v1174
        %v1292 = vpack.c.b16 %v1178, %v1175
        %v1293 = vpack.c.b16 %v1182, %v1179
        %v1294 = vpack.c.b16 %v1183, %v1180
        %v1295 = vpack.c.b16 %v1184, %v1181
        %v1296 = vpack.c.b16 %v1188, %v1185
        %v1297 = vpack.c.b16 %v1189, %v1186
        %v1298 = vpack.c.b16 %v1190, %v1187
        %v1299 = vpack.c.b16 %v1194, %v1191
        %v1300 = vpack.c.b16 %v1195, %v1192
        %v1301 = vpack.c.b16 %v1196, %v1193
        %v1302 = vpack.c.b16 %v1200, %v1197
        %v1303 = vpack.c.b16 %v1201, %v1198
        %v1304 = vpack.c.b16 %v1202, %v1199
        %v1305 = vpack.c.b16 %v1206, %v1203
        %v1306 = vpack.c.b16 %v1207, %v1204
        %v1307 = vpack.c.b16 %v1208, %v1205
        %v1308 = vpack.c.b16 %v1212, %v1209
        %v1309 = vpack.c.b16 %v1213, %v1210
        %v1310 = vpack.c.b16 %v1214, %v1211
        %1407 = vmatprep.subr.bf16.mxu0 %v1237
        %1408 = vmatpush1.bf16.msra.mxu0 %v1236
        %1409 = vmatprep.subr.bf16.mxu0 %v1234
        %1410 = vmatpush1.bf16.msra.mxu0 %v1233
        %1411 = vmatprep.subr.bf16.mxu0 %v1231
        %1412 = vmatpush1.bf16.msra.mxu0 %v1230
        %1413 = vmatprep.subr.bf16.mxu0 %v1228
        %1414 = vmatpush1.bf16.msra.mxu0 %v1227
        %1415 = vmatprep.subr.bf16.mxu0 %v1225
        %1416 = vmatpush1.bf16.msra.mxu0 %v1224
        %1417 = vmatprep.subr.bf16.mxu0 %v1222
        %1418 = vmatpush1.bf16.msra.mxu0 %v1221
        %1419 = vmatprep.subr.bf16.mxu0 %v1219
        %1420 = vmatpush1.bf16.msra.mxu0 %v1218
        %1421 = vmatprep.subr.bf16.mxu0 %v1216
        %1422 = vmatpush1.bf16.msra.mxu0 %v1215
        %1423 = vmatprep.subr.bf16.mxu0 %v1261
        %1424 = vmatpush2.bf16.msra.mxu0 %v1260
        %1425 = vmatprep.subr.bf16.mxu0 %v1258
        %1426 = vmatpush2.bf16.msra.mxu0 %v1257
        %1427 = vmatprep.subr.bf16.mxu0 %v1255
        %1428 = vmatpush2.bf16.msra.mxu0 %v1254
        %1429 = vmatprep.subr.bf16.mxu0 %v1252
        %1430 = vmatpush2.bf16.msra.mxu0 %v1251
        %1431 = vmatprep.subr.bf16.mxu0 %v1249
        %1432 = vmatpush2.bf16.msra.mxu0 %v1248
        %1433 = vmatprep.subr.bf16.mxu0 %v1246
        %1434 = vmatpush2.bf16.msra.mxu0 %v1245
        %1435 = vmatprep.subr.bf16.mxu0 %v1243
        %1436 = vmatpush2.bf16.msra.mxu0 %v1242
        %1437 = vmatprep.subr.bf16.mxu0 %v1240
        %1438 = vmatpush2.bf16.msra.mxu0 %v1239
        %1439 = vmatprep.mubr.bf16.mxu0 %v743
        %1440 = vmatmul.mubr.bf16.gmra.mxu0 %v742
        %v1441 = vpop.f32.mrf.mxu0
        %v1442 = vadd.f32 %v883, %v1441
        %v1443 = vpop.f32.mrf.mxu0
        %v1444 = vadd.f32 %v887, %v1443
        %v1445 = vpop.f32.mrf.mxu0
        %v1446 = vadd.f32 %v883, %v1445
        %v1447 = vpop.f32.mrf.mxu0
        %v1448 = vadd.f32 %v887, %v1447
        %1449 = vmatprep.mubr.bf16.mxu0 %v747
        %1450 = vmatmul.mubr.bf16.gmra.mxu0 %v746
        %v1451 = vpop.f32.mrf.mxu0
        %v1452 = vadd.f32 %v883, %v1451
        %v1453 = vpop.f32.mrf.mxu0
        %v1454 = vadd.f32 %v887, %v1453
        %v1455 = vpop.f32.mrf.mxu0
        %v1456 = vadd.f32 %v883, %v1455
        %v1457 = vpop.f32.mrf.mxu0
        %v1458 = vadd.f32 %v887, %v1457
        %1459 = vdwg.mxu0
        %1460 = vmatprep.subr.bf16.mxu0 %v1285
        %1461 = vmatpush1.bf16.msra.mxu0 %v1284
        %1462 = vmatprep.subr.bf16.mxu0 %v1282
        %1463 = vmatpush1.bf16.msra.mxu0 %v1281
        %1464 = vmatprep.subr.bf16.mxu0 %v1279
        %1465 = vmatpush1.bf16.msra.mxu0 %v1278
        %1466 = vmatprep.subr.bf16.mxu0 %v1276
        %1467 = vmatpush1.bf16.msra.mxu0 %v1275
        %1468 = vmatprep.subr.bf16.mxu0 %v1273
        %1469 = vmatpush1.bf16.msra.mxu0 %v1272
        %1470 = vmatprep.subr.bf16.mxu0 %v1270
        %1471 = vmatpush1.bf16.msra.mxu0 %v1269
        %1472 = vmatprep.subr.bf16.mxu0 %v1267
        %1473 = vmatpush1.bf16.msra.mxu0 %v1266
        %1474 = vmatprep.subr.bf16.mxu0 %v1264
        %1475 = vmatpush1.bf16.msra.mxu0 %v1263
        %1476 = vmatprep.subr.bf16.mxu0 %v1309
        %1477 = vmatpush2.bf16.msra.mxu0 %v1308
        %1478 = vmatprep.subr.bf16.mxu0 %v1306
        %1479 = vmatpush2.bf16.msra.mxu0 %v1305
        %1480 = vmatprep.subr.bf16.mxu0 %v1303
        %1481 = vmatpush2.bf16.msra.mxu0 %v1302
        %1482 = vmatprep.subr.bf16.mxu0 %v1300
        %1483 = vmatpush2.bf16.msra.mxu0 %v1299
        %1484 = vmatprep.subr.bf16.mxu0 %v1297
        %1485 = vmatpush2.bf16.msra.mxu0 %v1296
        %1486 = vmatprep.subr.bf16.mxu0 %v1294
        %1487 = vmatpush2.bf16.msra.mxu0 %v1293
        %1488 = vmatprep.subr.bf16.mxu0 %v1291
        %1489 = vmatpush2.bf16.msra.mxu0 %v1290
        %1490 = vmatprep.subr.bf16.mxu0 %v1288
        %1491 = vmatpush2.bf16.msra.mxu0 %v1287
        %1492 = vmatprep.mubr.bf16.mxu0 %v745
        %1493 = vmatmul.mubr.bf16.gmra.mxu0 %v744
        %v1494 = vpop.f32.mrf.mxu0
        %v1495 = vadd.f32 %v1442, %v1494
        %v1496 = vpop.f32.mrf.mxu0
        %v1497 = vadd.f32 %v1444, %v1496
        %v1498 = vpop.f32.mrf.mxu0
        %v1499 = vadd.f32 %v1446, %v1498
        %v1500 = vpop.f32.mrf.mxu0
        %v1501 = vadd.f32 %v1448, %v1500
        %1502 = vmatprep.mubr.bf16.mxu0 %v749
        %1503 = vmatmul.mubr.bf16.gmra.mxu0 %v748
        %v1504 = vpop.f32.mrf.mxu0
        %v1505 = vadd.f32 %v1452, %v1504
        %v1506 = vpop.f32.mrf.mxu0
        %v1507 = vadd.f32 %v1454, %v1506
        %v1508 = vpop.f32.mrf.mxu0
        %v1509 = vadd.f32 %v1456, %v1508
        %v1510 = vpop.f32.mrf.mxu0
        %v1511 = vadd.f32 %v1458, %v1510
        %1512 = vdwg.mxu0
        %1513 = vmatprep.subr.bf16.mxu0 0
        %1514 = vmatpush1.bf16.msra.mxu0 %v1238
        %1515 = vmatprep.subr.bf16.mxu0 0
        %1516 = vmatpush1.bf16.msra.mxu0 %v1235
        %1517 = vmatprep.subr.bf16.mxu0 0
        %1518 = vmatpush1.bf16.msra.mxu0 %v1232
        %1519 = vmatprep.subr.bf16.mxu0 0
        %1520 = vmatpush1.bf16.msra.mxu0 %v1229
        %1521 = vmatprep.subr.bf16.mxu0 0
        %1522 = vmatpush1.bf16.msra.mxu0 %v1226
        %1523 = vmatprep.subr.bf16.mxu0 0
        %1524 = vmatpush1.bf16.msra.mxu0 %v1223
        %1525 = vmatprep.subr.bf16.mxu0 0
        %1526 = vmatpush1.bf16.msra.mxu0 %v1220
        %1527 = vmatprep.subr.bf16.mxu0 0
        %1528 = vmatpush1.bf16.msra.mxu0 %v1217
        %1529 = vmatprep.subr.bf16.mxu0 0
        %1530 = vmatpush2.bf16.msra.mxu0 %v1262
        %1531 = vmatprep.subr.bf16.mxu0 0
        %1532 = vmatpush2.bf16.msra.mxu0 %v1259
        %1533 = vmatprep.subr.bf16.mxu0 0
        %1534 = vmatpush2.bf16.msra.mxu0 %v1256
        %1535 = vmatprep.subr.bf16.mxu0 0
        %1536 = vmatpush2.bf16.msra.mxu0 %v1253
        %1537 = vmatprep.subr.bf16.mxu0 0
        %1538 = vmatpush2.bf16.msra.mxu0 %v1250
        %1539 = vmatprep.subr.bf16.mxu0 0
        %1540 = vmatpush2.bf16.msra.mxu0 %v1247
        %1541 = vmatprep.subr.bf16.mxu0 0
        %1542 = vmatpush2.bf16.msra.mxu0 %v1244
        %1543 = vmatprep.subr.bf16.mxu0 0
        %1544 = vmatpush2.bf16.msra.mxu0 %v1241
        %1545 = vmatprep.mubr.bf16.mxu0 %v743
        %1546 = vmatmul.mubr.bf16.gmra.mxu0 %v742
        %v1547 = vpop.f32.mrf.mxu0
        %v1548 = vadd.f32 %v891, %v1547
        %v1549 = vpop.f32.mrf.mxu0
        %v1550 = vpop.f32.mrf.mxu0
        %v1551 = vadd.f32 %v891, %v1550
        %v1552 = vpop.f32.mrf.mxu0
        %1553 = vmatprep.mubr.bf16.mxu0 %v747
        %1554 = vmatmul.mubr.bf16.gmra.mxu0 %v746
        %v1555 = vpop.f32.mrf.mxu0
        %v1556 = vadd.f32 %v891, %v1555
        %v1557 = vpop.f32.mrf.mxu0
        %v1558 = vpop.f32.mrf.mxu0
        %v1559 = vadd.f32 %v891, %v1558
        %v1560 = vpop.f32.mrf.mxu0
        %1561 = vdwg.mxu0
        %1562 = vmatprep.subr.bf16.mxu0 0
        %1563 = vmatpush1.bf16.msra.mxu0 %v1286
        %1564 = vmatprep.subr.bf16.mxu0 0
        %1565 = vmatpush1.bf16.msra.mxu0 %v1283
        %1566 = vmatprep.subr.bf16.mxu0 0
        %1567 = vmatpush1.bf16.msra.mxu0 %v1280
        %1568 = vmatprep.subr.bf16.mxu0 0
        %1569 = vmatpush1.bf16.msra.mxu0 %v1277
        %1570 = vmatprep.subr.bf16.mxu0 0
        %1571 = vmatpush1.bf16.msra.mxu0 %v1274
        %1572 = vmatprep.subr.bf16.mxu0 0
        %1573 = vmatpush1.bf16.msra.mxu0 %v1271
        %1574 = vmatprep.subr.bf16.mxu0 0
        %1575 = vmatpush1.bf16.msra.mxu0 %v1268
        %1576 = vmatprep.subr.bf16.mxu0 0
        %1577 = vmatpush1.bf16.msra.mxu0 %v1265
        %1578 = vmatprep.subr.bf16.mxu0 0
        %1579 = vmatpush2.bf16.msra.mxu0 %v1310
        %1580 = vmatprep.subr.bf16.mxu0 0
        %1581 = vmatpush2.bf16.msra.mxu0 %v1307
        %1582 = vmatprep.subr.bf16.mxu0 0
        %1583 = vmatpush2.bf16.msra.mxu0 %v1304
        %1584 = vmatprep.subr.bf16.mxu0 0
        %1585 = vmatpush2.bf16.msra.mxu0 %v1301
        %1586 = vmatprep.subr.bf16.mxu0 0
        %1587 = vmatpush2.bf16.msra.mxu0 %v1298
        %1588 = vmatprep.subr.bf16.mxu0 0
        %1589 = vmatpush2.bf16.msra.mxu0 %v1295
        %1590 = vmatprep.subr.bf16.mxu0 0
        %1591 = vmatpush2.bf16.msra.mxu0 %v1292
        %1592 = vmatprep.subr.bf16.mxu0 0
        %1593 = vmatpush2.bf16.msra.mxu0 %v1289
        %1594 = vmatprep.mubr.bf16.mxu0 %v745
        %1595 = vmatmul.mubr.bf16.gmra.mxu0 %v744
        %v1596 = vpop.f32.mrf.mxu0
        %v1597 = vadd.f32 %v1548, %v1596
        %v1598 = vpop.f32.mrf.mxu0
        %v1599 = vpop.f32.mrf.mxu0
        %v1600 = vadd.f32 %v1551, %v1599
        %v1601 = vpop.f32.mrf.mxu0
        %1602 = vmatprep.mubr.bf16.mxu0 %v749
        %1603 = vmatmul.mubr.bf16.gmra.mxu0 %v748
        %v1604 = vpop.f32.mrf.mxu0
        %v1605 = vadd.f32 %v1556, %v1604
        %v1606 = vpop.f32.mrf.mxu0
        %v1607 = vpop.f32.mrf.mxu0
        %v1608 = vadd.f32 %v1559, %v1607
        %v1609 = vpop.f32.mrf.mxu0
        %1610 = vdwg.mxu0
        %v1611 = vmax.f32 %v1495, 0.0
        %v1612 = vmax.f32 %v1497, 0.0
        %v1613 = vmax.f32 %v1597, 0.0
        %v1614 = vmax.f32 %v1499, 0.0
        %v1615 = vmax.f32 %v1501, 0.0
        %v1616 = vmax.f32 %v1600, 0.0
        %v1617 = vmax.f32 %v1505, 0.0
        %v1618 = vmax.f32 %v1507, 0.0
        %v1619 = vmax.f32 %v1605, 0.0
        %v1620 = vmax.f32 %v1509, 0.0
        %v1621 = vmax.f32 %v1511, 0.0
        %v1622 = vmax.f32 %v1608, 0.0
        %v1623 = vpack.c.bf16 %v1614, %v1611
        %v1624 = vpack.c.bf16 %v1615, %v1612
        %v1625 = vpack.c.bf16 %v1616, %v1613
        %v1626 = vpack.c.bf16 %v1620, %v1617
        %v1627 = vpack.c.bf16 %v1621, %v1618
        %v1628 = vpack.c.bf16 %v1622, %v1619
        %v1629 = vld [vmem:[%s7] sm:$0xf]
        %v1630 = vld [vmem:[%s7 + $0x4] sm:$0xf]
        %v1631 = vld [vmem:[%s7 + $0x8] sm:$0xf]
        %v1632 = vld [vmem:[%s7 + $0xc] sm:$0xf]
        %v1633 = vld [vmem:[%s7 + $0x10] sm:$0xf]
        %v1634 = vld [vmem:[%s7 + $0x14] sm:$0xf]
        %v1635 = vld [vmem:[%s7 + $0x18] sm:$0xf]
        %v1636 = vld [vmem:[%s7 + $0x1c] sm:$0xf]
        %v1637 = vld [vmem:[%s7 + $0x20] sm:$0xf]
        %v1638 = vld [vmem:[%s7 + $0x24] sm:$0xf]
        %v1639 = vld [vmem:[%s7 + $0x28] sm:$0xf]
        %v1640 = vld [vmem:[%s7 + $0x2c] sm:$0xf]
        %v1641 = vld [vmem:[%s7 + $0x30] sm:$0xf]
        %v1642 = vld [vmem:[%s7 + $0x34] sm:$0xf]
        %v1643 = vld [vmem:[%s7 + $0x38] sm:$0xf]
        %v1644 = vld [vmem:[%s7 + $0x3c] sm:$0xf]
        %v1645 = vld [vmem:[%s7 + $0x40] sm:$0xf]
        %v1646 = vld [vmem:[%s7 + $0x44] sm:$0xf]
        %v1647 = vld [vmem:[%s7 + $0x48] sm:$0xf]
        %v1648 = vld [vmem:[%s7 + $0x4c] sm:$0xf]
        %v1649 = vld [vmem:[%s7 + $0x50] sm:$0xf]
        %v1650 = vld [vmem:[%s7 + $0x54] sm:$0xf]
        %v1651 = vld [vmem:[%s7 + $0x58] sm:$0xf]
        %v1652 = vld [vmem:[%s7 + $0x5c] sm:$0xf]
        %v1653 = vld [vmem:[%s7 + $0x60] sm:$0xf]
        %v1654 = vld [vmem:[%s7 + $0x64] sm:$0xf]
        %v1655 = vld [vmem:[%s7 + $0x68] sm:$0xf]
        %v1656 = vld [vmem:[%s7 + $0x6c] sm:$0xf]
        %v1657 = vld [vmem:[%s7 + $0x70] sm:$0xf]
        %v1658 = vld [vmem:[%s7 + $0x74] sm:$0xf]
        %v1659 = vld [vmem:[%s7 + $0x78] sm:$0xf]
        %v1660 = vld [vmem:[%s7 + $0x7c] sm:$0xf]
        %v1661 = vld [vmem:[%s7 + $0x80] sm:$0xf]
        %v1662 = vld [vmem:[%s7 + $0x84] sm:$0xf]
        %v1663 = vld [vmem:[%s7 + $0x88] sm:$0xf]
        %v1664 = vld [vmem:[%s7 + $0x8c] sm:$0xf]
        %v1665 = vld [vmem:[%s7 + $0x90] sm:$0xf]
        %v1666 = vld [vmem:[%s7 + $0x94] sm:$0xf]
        %v1667 = vld [vmem:[%s7 + $0x98] sm:$0xf]
        %v1668 = vld [vmem:[%s7 + $0x9c] sm:$0xf]
        %v1669 = vld [vmem:[%s7 + $0xa0] sm:$0xf]
        %v1670 = vld [vmem:[%s7 + $0xa4] sm:$0xf]
        %v1671 = vld [vmem:[%s7 + $0xa8] sm:$0xf]
        %v1672 = vld [vmem:[%s7 + $0xac] sm:$0xf]
        %v1673 = vld [vmem:[%s7 + $0xb0] sm:$0xf]
        %v1674 = vld [vmem:[%s7 + $0xb4] sm:$0xf]
        %v1675 = vld [vmem:[%s7 + $0xb8] sm:$0xf]
        %v1676 = vld [vmem:[%s7 + $0xbc] sm:$0xf]
        %v1677 = vld [vmem:[%s8] sm:$0x1]
        %v1679 = vlaneseq
        %v1680 = vshrl.u32 %v1679, 7
        %v1681 = vsub.s32 0, %v1680
        %v1682 = vrot.slane %v1677, %v1681
        %v1732 = vunpack.c.l.b16 %v1629
        %v1733 = vunpack.c.l.b16 %v1630
        %v1734 = vunpack.c.l.b16 %v1631
        %v1735 = vunpack.c.l.b16 %v1632
        %v1736 = vunpack.c.l.b16 %v1633
        %v1737 = vunpack.c.l.b16 %v1634
        %v1738 = vunpack.c.l.b16 %v1635
        %v1739 = vunpack.c.l.b16 %v1636
        %v1740 = vunpack.c.l.b16 %v1637
        %v1741 = vunpack.c.l.b16 %v1638
        %v1742 = vunpack.c.l.b16 %v1639
        %v1743 = vunpack.c.l.b16 %v1640
        %v1744 = vunpack.c.l.b16 %v1641
        %v1745 = vunpack.c.l.b16 %v1642
        %v1746 = vunpack.c.l.b16 %v1643
        %v1747 = vunpack.c.l.b16 %v1644
        %v1748 = vunpack.c.l.b16 %v1645
        %v1749 = vunpack.c.l.b16 %v1646
        %v1750 = vunpack.c.l.b16 %v1647
        %v1751 = vunpack.c.l.b16 %v1648
        %v1752 = vunpack.c.l.b16 %v1649
        %v1753 = vunpack.c.l.b16 %v1650
        %v1754 = vunpack.c.l.b16 %v1651
        %v1755 = vunpack.c.l.b16 %v1652
        %v1756 = vunpack.c.l.b16 %v1653
        %v1757 = vunpack.c.l.b16 %v1654
        %v1758 = vunpack.c.l.b16 %v1655
        %v1759 = vunpack.c.l.b16 %v1656
        %v1760 = vunpack.c.l.b16 %v1657
        %v1761 = vunpack.c.l.b16 %v1658
        %v1762 = vunpack.c.l.b16 %v1659
        %v1763 = vunpack.c.l.b16 %v1660
        %v1764 = vunpack.c.l.b16 %v1661
        %v1765 = vunpack.c.l.b16 %v1662
        %v1766 = vunpack.c.l.b16 %v1663
        %v1767 = vunpack.c.l.b16 %v1664
        %v1768 = vunpack.c.l.b16 %v1665
        %v1769 = vunpack.c.l.b16 %v1666
        %v1770 = vunpack.c.l.b16 %v1667
        %v1771 = vunpack.c.l.b16 %v1668
        %v1772 = vunpack.c.l.b16 %v1669
        %v1773 = vunpack.c.l.b16 %v1670
        %v1774 = vunpack.c.l.b16 %v1671
        %v1775 = vunpack.c.l.b16 %v1672
        %v1776 = vunpack.c.l.b16 %v1673
        %v1777 = vunpack.c.l.b16 %v1674
        %v1778 = vunpack.c.l.b16 %v1675
        %v1779 = vunpack.c.l.b16 %v1676
        %v1780 = vpack.c.b16 %v1733, %v1732
        %v1781 = vpack.c.b16 %v1735, %v1734
        %v1782 = vpack.c.b16 %v1737, %v1736
        %v1783 = vpack.c.b16 %v1739, %v1738
        %v1784 = vpack.c.b16 %v1741, %v1740
        %v1785 = vpack.c.b16 %v1743, %v1742
        %v1786 = vpack.c.b16 %v1745, %v1744
        %v1787 = vpack.c.b16 %v1747, %v1746
        %v1788 = vpack.c.b16 %v1749, %v1748
        %v1789 = vpack.c.b16 %v1751, %v1750
        %v1790 = vpack.c.b16 %v1753, %v1752
        %v1791 = vpack.c.b16 %v1755, %v1754
        %v1792 = vpack.c.b16 %v1757, %v1756
        %v1793 = vpack.c.b16 %v1759, %v1758
        %v1794 = vpack.c.b16 %v1761, %v1760
        %v1795 = vpack.c.b16 %v1763, %v1762
        %v1796 = vpack.c.b16 %v1765, %v1764
        %v1797 = vpack.c.b16 %v1767, %v1766
        %v1798 = vpack.c.b16 %v1769, %v1768
        %v1799 = vpack.c.b16 %v1771, %v1770
        %v1800 = vpack.c.b16 %v1773, %v1772
        %v1801 = vpack.c.b16 %v1775, %v1774
        %v1802 = vpack.c.b16 %v1777, %v1776
        %v1803 = vpack.c.b16 %v1779, %v1778
        %1828 = vmatprep.subr.bf16.mxu0 0
        %1829 = vmatpush1.bf16.msra.mxu0 %v1787
        %1830 = vmatprep.subr.bf16.mxu0 0
        %1831 = vmatpush1.bf16.msra.mxu0 %v1786
        %1832 = vmatprep.subr.bf16.mxu0 0
        %1833 = vmatpush1.bf16.msra.mxu0 %v1785
        %1834 = vmatprep.subr.bf16.mxu0 0
        %1835 = vmatpush1.bf16.msra.mxu0 %v1784
        %1836 = vmatprep.subr.bf16.mxu0 0
        %1837 = vmatpush1.bf16.msra.mxu0 %v1783
        %1838 = vmatprep.subr.bf16.mxu0 0
        %1839 = vmatpush1.bf16.msra.mxu0 %v1782
        %1840 = vmatprep.subr.bf16.mxu0 0
        %1841 = vmatpush1.bf16.msra.mxu0 %v1781
        %1842 = vmatprep.subr.bf16.mxu0 0
        %1843 = vmatpush1.bf16.msra.mxu0 %v1780
        %1844 = vmatprep.subr.bf16.mxu0 0
        %1845 = vmatpush2.bf16.msra.mxu0 %v1795
        %1846 = vmatprep.subr.bf16.mxu0 0
        %1847 = vmatpush2.bf16.msra.mxu0 %v1794
        %1848 = vmatprep.subr.bf16.mxu0 0
        %1849 = vmatpush2.bf16.msra.mxu0 %v1793
        %1850 = vmatprep.subr.bf16.mxu0 0
        %1851 = vmatpush2.bf16.msra.mxu0 %v1792
        %1852 = vmatprep.subr.bf16.mxu0 0
        %1853 = vmatpush2.bf16.msra.mxu0 %v1791
        %1854 = vmatprep.subr.bf16.mxu0 0
        %1855 = vmatpush2.bf16.msra.mxu0 %v1790
        %1856 = vmatprep.subr.bf16.mxu0 0
        %1857 = vmatpush2.bf16.msra.mxu0 %v1789
        %1858 = vmatprep.subr.bf16.mxu0 0
        %1859 = vmatpush2.bf16.msra.mxu0 %v1788
        %1860 = vmatprep.mubr.bf16.mxu0 %v1624
        %1861 = vmatmul.mubr.bf16.gmra.mxu0 %v1623
        %v1862 = vpop.f32.mrf.mxu0
        %v1863 = vadd.f32 %v1682, %v1862
        %v1864 = vpop.f32.mrf.mxu0
        %v1865 = vpop.f32.mrf.mxu0
        %v1866 = vadd.f32 %v1682, %v1865
        %v1867 = vpop.f32.mrf.mxu0
        %1868 = vmatprep.mubr.bf16.mxu0 %v1627
        %1869 = vmatmul.mubr.bf16.gmra.mxu0 %v1626
        %v1870 = vpop.f32.mrf.mxu0
        %v1871 = vadd.f32 %v1682, %v1870
        %v1872 = vpop.f32.mrf.mxu0
        %v1873 = vpop.f32.mrf.mxu0
        %v1874 = vadd.f32 %v1682, %v1873
        %v1875 = vpop.f32.mrf.mxu0
        %1876 = vdwg.mxu0
        %1877 = vmatprep.subr.bf16.mxu0 0
        %1878 = vmatpush1.bf16.msra.mxu0 %v1803
        %1879 = vmatprep.subr.bf16.mxu0 0
        %1880 = vmatpush1.bf16.msra.mxu0 %v1802
        %1881 = vmatprep.subr.bf16.mxu0 0
        %1882 = vmatpush1.bf16.msra.mxu0 %v1801
        %1883 = vmatprep.subr.bf16.mxu0 0
        %1884 = vmatpush1.bf16.msra.mxu0 %v1800
        %1885 = vmatprep.subr.bf16.mxu0 0
        %1886 = vmatpush1.bf16.msra.mxu0 %v1799
        %1887 = vmatprep.subr.bf16.mxu0 0
        %1888 = vmatpush1.bf16.msra.mxu0 %v1798
        %1889 = vmatprep.subr.bf16.mxu0 0
        %1890 = vmatpush1.bf16.msra.mxu0 %v1797
        %1891 = vmatprep.subr.bf16.mxu0 0
        %1892 = vmatpush1.bf16.msra.mxu0 %v1796
        %1893 = vmatprep.subr.bf16.mxu0 0
        %1894 = vmatpush2.bf16.msra.mxu0 0
        %1895 = vmatprep.subr.bf16.mxu0 0
        %1896 = vmatpush2.bf16.msra.mxu0 0
        %1897 = vmatprep.subr.bf16.mxu0 0
        %1898 = vmatpush2.bf16.msra.mxu0 0
        %1899 = vmatprep.subr.bf16.mxu0 0
        %1900 = vmatpush2.bf16.msra.mxu0 0
        %1901 = vmatprep.subr.bf16.mxu0 0
        %1902 = vmatpush2.bf16.msra.mxu0 0
        %1903 = vmatprep.subr.bf16.mxu0 0
        %1904 = vmatpush2.bf16.msra.mxu0 0
        %1905 = vmatprep.subr.bf16.mxu0 0
        %1906 = vmatpush2.bf16.msra.mxu0 0
        %1907 = vmatprep.subr.bf16.mxu0 0
        %1908 = vmatpush2.bf16.msra.mxu0 0
        %1909 = vmatprep.mubr.bf16.mxu0 0
        %1910 = vmatmul.mubr.bf16.gmra.mxu0 %v1625
        %v1911 = vpop.f32.mrf.mxu0
        %v1912 = vadd.f32 %v1863, %v1911
        %v1913 = vpop.f32.mrf.mxu0
        %v1914 = vpop.f32.mrf.mxu0
        %v1915 = vadd.f32 %v1866, %v1914
        %v1916 = vpop.f32.mrf.mxu0
        %1917 = vmatprep.mubr.bf16.mxu0 0
        %1918 = vmatmul.mubr.bf16.gmra.mxu0 %v1628
        %v1919 = vpop.f32.mrf.mxu0
        %v1920 = vadd.f32 %v1871, %v1919
        %v1921 = vpop.f32.mrf.mxu0
        %v1922 = vpop.f32.mrf.mxu0
        %v1923 = vadd.f32 %v1874, %v1922
        %v1924 = vpop.f32.mrf.mxu0
        %1925 = vdwg.mxu0
        %v1926 = vtanh.pop %v1912
        %v1927 = vtanh.pop %v1915
        %v1928 = vtanh.pop %v1920
        %v1929 = vtanh.pop %v1923
        %v1930 = vmul.f32 %v1926, 0.05
        %v1931 = vmul.f32 %v1927, 0.05
        %v1932 = vmul.f32 %v1928, 0.05
        %v1933 = vmul.f32 %v1929, 0.05
        %v1934 = vadd.f32 %v1930, %v374
        %v1935 = vadd.f32 %v1931, %v375
        %v1936 = vadd.f32 %v1932, %v376
        %v1937 = vadd.f32 %v1933, %v377
        %v1938 = vmax.f32 %v1934, -1.0
        %v1939 = vmax.f32 %v1935, -1.0
        %v1940 = vmax.f32 %v1936, -1.0
        %v1941 = vmax.f32 %v1937, -1.0
        %v1942 = vmin.f32 %v1938, 1.0
        %v1943 = vmin.f32 %v1939, 1.0
        %v1944 = vmin.f32 %v1940, 1.0
        %v1945 = vmin.f32 %v1941, 1.0
        %1946 = vst.msk [vmem:[%s371] sm:$0xff] %vm404, %v1942
        %1947 = vst.msk [vmem:[%s371 + $0x8] sm:$0xff] %vm404, %v1943
        %1948 = vst.msk [vmem:[%s371 + $0x10] sm:$0xff] %vm404, %v1944
        %1949 = vst.msk [vmem:[%s371 + $0x18] sm:$0xff] %vm404, %v1945
        %s1950 = smul.u32 4, %s21
        %p1951 = scmp.lt.s32.totalorder %s1950, 7
        %s1952 = scalar_select %p1951, %s1950, 7
        %s1953 = smul.addr %s1952, 8
        %s1954 = scalar_lea.vmem %s9, %s1953
        // Predicated region
        $region61: #{tpu_custom_call.1} parent=55 // pred_check
          %p1955 = pneg %p238
        $region62: #{tpu_custom_call.1} parent=55 // pred_check_branch
          %1957 = sbr.rel (%p1955) target = $region64
        $region63: #{tpu_custom_call.1} parent=55 // pred_region
          %s1958 = smul.u32 4, %s21
        $region64: #{tpu_custom_call.1} parent=55 // pred_fallthru
          _
      $region56: #{tpu_custom_call.1} parent=5 // pred_fallthru
        _
      %p1959 = scmp.le.s32.totalorder 2, %s16
      // Predicated region
      $region65: #{tpu_custom_call.1} parent=5 // pred_check
        %p1960 = pneg %p1959
      $region66: #{tpu_custom_call.1} parent=5 // pred_check_branch
        %1962 = sbr.rel (%p1960) target = $region68
      $region67: #{tpu_custom_call.1} parent=5 // pred_region
        %s1963 = ssub.s32 %s16, 2
        // Predicated region
        $region69: #{tpu_custom_call.1} parent=67 // pred_check
          %p1964 = pneg %p244
        $region70: #{tpu_custom_call.1} parent=67 // pred_check_branch
          %1966 = sbr.rel (%p1964) target = $region72
        $region71: #{tpu_custom_call.1} parent=67 // pred_region
          %s1967 = smul.u32 4, %s22
          %p1968 = scmp.lt.s32.totalorder %s1967, 7
          %s1969 = scalar_select %p1968, %s1967, 7
          %s1970 = smul.addr %s1969, 8
          %s1971 = scalar_lea.vmem %s9, %s1970
        $region72: #{tpu_custom_call.1} parent=67 // pred_fallthru
          _
      $region68: #{tpu_custom_call.1} parent=5 // pred_fallthru
        _
    $region6: #{tpu_custom_call.1} parent=1 // loop_footer
      %s20 = sadd.s32 1, %s16
    $region7: #{tpu_custom_call.1} parent=1 // loop_footer_branch
      %15 = sbr.rel target = $region3
    $region8: #{tpu_custom_call.1} parent=1 // loop_exit
      _
    %1972 = vsyncpa [#allocation3], 1
    %s1973 = scalar_lea.sflag [#allocation3], 1
    %1974 = vsyncpa %s1973, 1

</llo_original>
